<compile_context>
chip_gen: v7x
topology: tpu7x:2x2x1
jax: 0.10.0
libtpu: 0.0.40
codegen_flags: <defaults>
</compile_context>

<pallas_src>
import functools

import jax
import jax.numpy as jnp
import numpy as np
from jax.experimental import pallas as pl
from jax.experimental.pallas import tpu as pltpu


# ---------------------------------------------------------------------------
# Pallas kernel: one batch tile (TB elements) per grid step.
# ---------------------------------------------------------------------------
def _biaffine_parser_kernel(
    hs_ref,            # (TB*N, D)     encoder states, batch tile flattened
    w_all_ref,         # (D, 2Hh+2Hd)  fused MLP weight (pre-transposed)
    b_all_ref,         # (1, 2Hh+2Hd)  fused MLP bias
    u_head_ref,        # (Hh, Hh)
    r_head_ref,        # (1, Hh)       ones-row of x1 (folded)
    v_head_ref,        # (Hh, 1)       ones-col of x2 (folded)
    c_head_ref,        # (1, 1)        constant term + bias (folded)
    u_dep_ref,         # (Hd, R*Hd)    U packed relation-major along lanes
    r_dep_ref,         # (1, R*Hd)
    v_dep_ref,         # (Hd, R)
    c_dep_ref,         # (1, R)
    head_out_ref,      # (TB, N, N)
    dep_out_ref,       # (TB, N, R*N)  lane-dense: element [t, i, r*N + j]
):
    f32 = jnp.float32
    tb, n, _ = head_out_ref.shape
    hh = u_head_ref.shape[0]
    hd = u_dep_ref.shape[0]
    n_rel = v_dep_ref.shape[1]

    # ---- fused MLPs: ONE (TB*N, D) @ (D, 2Hh+2Hd) matmul, then leaky_relu ----
    h_all = jax.lax.dot_general(
        hs_ref[...], w_all_ref[...], (((1,), (0,)), ((), ())),
        preferred_element_type=f32) + b_all_ref[...]
    h_all = jnp.where(h_all >= 0, h_all, 0.1 * h_all)     # leaky_relu(0.1)

    h_hi_all = h_all[:, 0:hh]                   # mlp_head_in(hs)
    h_ho_all = h_all[:, hh:2 * hh]              # mlp_head_out(hs)
    h_di_all = h_all[:, 2 * hh:2 * hh + hd]     # mlp_deprel_in(hs)
    h_do_all = h_all[:, 2 * hh + hd:]           # mlp_deprel_out(hs)

    mm = functools.partial(jax.lax.dot_general,
                           dimension_numbers=(((1,), (0,)), ((), ())),
                           preferred_element_type=f32)

    for t in range(tb):                         # static, small batch tile
        rows = slice(t * n, (t + 1) * n)
        h_hi, h_ho = h_hi_all[rows], h_ho_all[rows]
        h_di, h_do = h_di_all[rows], h_do_all[rows]

        # ---- head biaffine (out_features == 1), ones-column folded in ----
        # logits[i,j] = h_ho[i] U h_hi[j] + r.h_hi[j] + (h_ho[i].v + c)
        z = mm(h_ho, u_head_ref[...]) + r_head_ref[...]          # (N, Hh)
        row = jax.lax.dot_general(z, h_hi, (((1,), (1,)), ((), ())),
                                  preferred_element_type=f32)    # (N, N)
        col = mm(h_ho, v_head_ref[...]) + c_head_ref[...]        # (N, 1)
        head_out_ref[t] = row + col

        # ---- deprel biaffine: first contraction + col terms batched over R ----
        z_all = mm(h_do, u_dep_ref[...]) + r_dep_ref[...]        # (N, R*Hd)
        col_all = mm(h_do, v_dep_ref[...]) + c_dep_ref[...]      # (N, R)
        h_di_t = jnp.transpose(h_di)             # hoisted out of relation loop
        for o in range(n_rel):                   # static unroll (fine, R small)
            z_o = z_all[:, o * hd:(o + 1) * hd]                  # (N, Hd)
            row_o = mm(z_o, h_di_t)                              # (N, N)
            dep_out_ref[t, :, o * n:(o + 1) * n] = row_o + col_all[:, o:o + 1]


# ---------------------------------------------------------------------------
# Wrapper: parameter repacking + pallas_call + length masking (glue).
# ---------------------------------------------------------------------------
def _pick_batch_tile(batch, seq):
    """Batch elements packed per grid step: fill the MXU M-dim for small N,
    keep the second-minor block dim 8-aligned, prefer >=2 grid steps."""
    def legal(tb):
        return batch % tb == 0 and ((tb * seq) % 8 == 0 or tb == batch)
    best = next(tb for tb in range(1, batch + 1) if legal(tb))
    for tb in range(1, batch + 1):
        if legal(tb) and tb * seq <= 512 and batch // tb >= 2:
            best = tb
    return best


@jax.jit
def biaffine_parser_forward(hs, lengths, params):
    B, N, D = hs.shape
    Hh = params["w_hi"].shape[0]
    Hd = params["w_di"].shape[0]
    R = params["wb_dep"].shape[1]
    TB = _pick_batch_tile(B, N)
    Hsum = 2 * Hh + 2 * Hd

    # --- fused MLP weights (one matmul in the kernel) ---
    w_all_t = jnp.concatenate(
        [params["w_hi"], params["w_ho"], params["w_di"], params["w_do"]],
        axis=0).T                                                  # (D, Hsum)
    b_all = jnp.concatenate(
        [params["b_hi"], params["b_ho"], params["b_di"], params["b_do"]])[None, :]

    # --- head biaffine: split augmented bilinear weight (ones-column folded) ---
    wb_h = params["wb_head"]                    # (Hh+1, 1, Hh+1)
    u_head = wb_h[:Hh, 0, :Hh]                  # (Hh, Hh)
    r_head = wb_h[Hh, 0, :Hh][None, :]          # (1, Hh)
    v_head = wb_h[:Hh, 0, Hh][:, None]          # (Hh, 1)
    c_head = (wb_h[Hh, 0, Hh] + params["bias_head"][0]).reshape(1, 1)

    # --- deprel biaffine: pack all R relations relation-major along lanes ---
    wb_d = params["wb_dep"]                     # (Hd+1, R, Hd+1)
    u_dep = wb_d[:Hd, :, :Hd].reshape(Hd, R * Hd)
    r_dep = wb_d[Hd, :, :Hd].reshape(1, R * Hd)
    v_dep = wb_d[:Hd, :, Hd]                    # (Hd, R)
    c_dep = (wb_d[Hd, :, Hd] + params["bias_dep"]).reshape(1, R)

    hs_flat = hs.reshape(B * N, D)              # free, contiguous
    rep = lambda b: (0, 0)

    grid_spec = pltpu.PrefetchScalarGridSpec(
        num_scalar_prefetch=0,
        grid=(B // TB,),
        in_specs=[
            pl.BlockSpec((TB * N, D), lambda b: (b, 0)),   # hs (token tile)
            pl.BlockSpec((D, Hsum), rep),                  # fused MLP weight
            pl.BlockSpec((1, Hsum), rep),                  # fused MLP bias
            pl.BlockSpec((Hh, Hh), rep),                   # u_head
            pl.BlockSpec((1, Hh), rep),                    # r_head
            pl.BlockSpec((Hh, 1), rep),                    # v_head
            pl.BlockSpec((1, 1), rep),                     # c_head
            pl.BlockSpec((Hd, R * Hd), rep),               # u_dep (packed)
            pl.BlockSpec((1, R * Hd), rep),                # r_dep (packed)
            pl.BlockSpec((Hd, R), rep),                    # v_dep
            pl.BlockSpec((1, R), rep),                     # c_dep
        ],
        out_specs=[
            pl.BlockSpec((TB, N, N), lambda b: (b, 0, 0)),
            pl.BlockSpec((TB, N, R * N), lambda b: (b, 0, 0)),   # lane-dense
        ],
    )

    # explicit scoped-VMEM limit: generous but safe on v7x (64 MiB physical)
    block_bytes = 4 * (TB * N * D + D * Hsum + Hsum
                       + Hh * Hh + 2 * Hh + 1
                       + Hd * R * Hd + R * Hd + Hd * R + R
                       + TB * N * N + TB * N * R * N)
    vmem_limit = int(min(max(2.5 * block_bytes + (8 << 20), 32 << 20), 56 << 20))

    logits_head, dep_lane = pl.pallas_call(
        _biaffine_parser_kernel,
        out_shape=(
            jax.ShapeDtypeStruct((B, N, N), jnp.float32),
            jax.ShapeDtypeStruct((B, N, R * N), jnp.float32),
        ),
        grid_spec=grid_spec,
        compiler_params=pltpu.CompilerParams(
            dimension_semantics=("parallel",),
            vmem_limit_bytes=vmem_limit),
    )(
        hs_flat, w_all_t, b_all,
        u_head, r_head, v_head, c_head,
        u_dep, r_dep, v_dep, c_dep,
    )

    # _mask_arc(lengths, mask_diag=False) + masked_fill_(-inf)   (glue)
    ar = jnp.arange(N)
    valid = ar[None, :] < lengths[:, None]                  # (B, N)
    mask = valid[:, :, None] & valid[:, None, :]            # (B, N, N)
    logits_head = jnp.where(mask, logits_head, -jnp.inf)

    # (B, N, R*N) --free reshape--> (B, N, R, N) --> PyTorch's (B, N, N, R)
    # (downstream could consume (B, N, R, N) directly and skip this transpose)
    logits_deprel = jnp.transpose(dep_lane.reshape(B, N, R, N), (0, 1, 3, 2))
    return logits_head, logits_deprel, lengths


# ---------------------------------------------------------------------------
# Pure-JAX reference (mirrors the PyTorch module literally) for verification.
# ---------------------------------------------------------------------------
def _reference_forward(hs, lengths, params):
    def mlp(x, w, b):
        h = x @ w.T + b
        return jnp.where(h >= 0, h, 0.1 * h)

    def biaffine(x1, x2, w_full, bias):
        ones = jnp.ones(x1.shape[:-1] + (1,), x1.dtype)
        x1a = jnp.concatenate([x1, ones], axis=-1)
        x2a = jnp.concatenate([x2, ones], axis=-1)
        return jnp.einsum("bip,poq,bjq->bijo", x1a, w_full, x2a) + bias

    h_hi = mlp(hs, params["w_hi"], params["b_hi"])
    h_ho = mlp(hs, params["w_ho"], params["b_ho"])
    logits_head = biaffine(h_ho, h_hi, params["wb_head"], params["bias_head"])[..., 0]

    B, N, _ = hs.shape
    ar = jnp.arange(N)
    valid = ar[None, :] < lengths[:, None]
    mask = valid[:, :, None] & valid[:, None, :]
    logits_head = jnp.where(mask, logits_head, -jnp.inf)

    h_di = mlp(hs, params["w_di"], params["b_di"])
    h_do = mlp(hs, params["w_do"], params["b_do"])
    logits_deprel = biaffine(h_do, h_di, params["wb_dep"], params["bias_dep"])
    return logits_head, logits_deprel, lengths


if __name__ == "__main__":
    # small shapes consistent with the module: encoder.out_size=D, seq=N
    B, N, D = 2, 8, 32
    Hh, Hd, R = 64, 32, 8   # head_mlp_units, deprel_mlp_units, n_deprels

    key = jax.random.PRNGKey(0)
    ks = jax.random.split(key, 12)
    u = lambda k, shape: jax.random.uniform(k, shape, jnp.float32, -0.1, 0.1)

    hs = jax.random.normal(ks[0], (B, N, D), jnp.float32)   # encoder output
    lengths = jnp.array([N, N - 2], jnp.int32)

    # NOTE: the real Biaffine zero-inits its bilinear weight/bias; we use
    # deterministic nonzero values so the kernel output is non-trivial.
    params = dict(
        w_hi=u(ks[1], (Hh, D)), b_hi=u(ks[2], (Hh,)),
        w_ho=u(ks[3], (Hh, D)), b_ho=u(ks[4], (Hh,)),
        wb_head=u(ks[5], (Hh + 1, 1, Hh + 1)), bias_head=u(ks[6], (1,)),
        w_di=u(ks[7], (Hd, D)), b_di=u(ks[8], (Hd,)),
        w_do=u(ks[9], (Hd, D)), b_do=u(ks[10], (Hd,)),
        wb_dep=u(ks[11], (Hd + 1, R, Hd + 1)),
        bias_dep=u(jax.random.fold_in(key, 99), (R,)),
    )

    lh, ld, ln = biaffine_parser_forward(hs, lengths, params)
    jax.block_until_ready((lh, ld, ln))

    lh_ref, ld_ref, _ = _reference_forward(hs, lengths, params)
    assert lh.shape == (B, N, N) and ld.shape == (B, N, N, R)
    np.testing.assert_allclose(np.asarray(lh), np.asarray(lh_ref), rtol=1e-2, atol=1e-2)
    np.testing.assert_allclose(np.asarray(ld), np.asarray(ld_ref), rtol=1e-2, atol=1e-2)

    print("KERNEL_OK")
</pallas_src>

<mosaic_0001>
module attributes {stable_mosaic.version = 11 : i64} {
  func.func @_biaffine_parser_kernel(%arg0: i32, %arg1: memref<8x32xf32, #tpu.memory_space<vmem>>, %arg2: memref<32x192xf32, #tpu.memory_space<vmem>>, %arg3: memref<1x192xf32, #tpu.memory_space<vmem>>, %arg4: memref<64x64xf32, #tpu.memory_space<vmem>>, %arg5: memref<1x64xf32, #tpu.memory_space<vmem>>, %arg6: memref<64x1xf32, #tpu.memory_space<vmem>>, %arg7: memref<1x1xf32, #tpu.memory_space<vmem>>, %arg8: memref<32x256xf32, #tpu.memory_space<vmem>>, %arg9: memref<1x256xf32, #tpu.memory_space<vmem>>, %arg10: memref<32x8xf32, #tpu.memory_space<vmem>>, %arg11: memref<1x8xf32, #tpu.memory_space<vmem>>, %arg12: memref<1x8x8xf32, #tpu.memory_space<vmem>>, %arg13: memref<1x8x64xf32, #tpu.memory_space<vmem>>) attributes {dimension_semantics = [#tpu.dimension_semantics<parallel>], iteration_bounds = array<i64: 2>, scalar_prefetch = 0 : i64, scratch_operands = 0 : i64, tpu.core_type = #tpu.core_type<tc>, window_params = [{transform_indices = @transform_0, window_bounds = array<i64: 8, 32>}, {pipeline_mode = #tpu.pipeline_mode<synchronous>, transform_indices = @transform_1, window_bounds = array<i64: 32, 192>}, {pipeline_mode = #tpu.pipeline_mode<synchronous>, transform_indices = @transform_2, window_bounds = array<i64: 1, 192>}, {pipeline_mode = #tpu.pipeline_mode<synchronous>, transform_indices = @transform_3, window_bounds = array<i64: 64, 64>}, {pipeline_mode = #tpu.pipeline_mode<synchronous>, transform_indices = @transform_4, window_bounds = array<i64: 1, 64>}, {pipeline_mode = #tpu.pipeline_mode<synchronous>, transform_indices = @transform_5, window_bounds = array<i64: 64, 1>}, {pipeline_mode = #tpu.pipeline_mode<synchronous>, transform_indices = @transform_6, window_bounds = array<i64: 1, 1>}, {pipeline_mode = #tpu.pipeline_mode<synchronous>, transform_indices = @transform_7, window_bounds = array<i64: 32, 256>}, {pipeline_mode = #tpu.pipeline_mode<synchronous>, transform_indices = @transform_8, window_bounds = array<i64: 1, 256>}, {pipeline_mode = #tpu.pipeline_mode<synchronous>, transform_indices = @transform_9, window_bounds = array<i64: 32, 8>}, {pipeline_mode = #tpu.pipeline_mode<synchronous>, transform_indices = @transform_10, window_bounds = array<i64: 1, 8>}, {transform_indices = @transform_11, window_bounds = array<i64: 1, 8, 8>}, {transform_indices = @transform_12, window_bounds = array<i64: 1, 8, 64>}]} {
    %c0 = arith.constant 0 : index
    %c0_0 = arith.constant 0 : index
    %0 = vector.load %arg1[%c0, %c0_0] : memref<8x32xf32, #tpu.memory_space<vmem>>, vector<8x32xf32>
    %c0_1 = arith.constant 0 : index
    %c0_2 = arith.constant 0 : index
    %1 = vector.load %arg2[%c0_1, %c0_2] : memref<32x192xf32, #tpu.memory_space<vmem>>, vector<32x192xf32>
    %cst = arith.constant dense<0.000000e+00> : vector<8x192xf32>
    %2 = tpu.matmul %0, %1, %cst {dimension_numbers = #tpu.dot_dimension_numbers<[1], [0], [0], [1], [0, 0, 1, 1], [], []>} : vector<8x32xf32>, vector<32x192xf32>, vector<8x192xf32> -> vector<8x192xf32>
    %c0_3 = arith.constant 0 : index
    %c0_4 = arith.constant 0 : index
    %3 = vector.load %arg3[%c0_3, %c0_4] : memref<1x192xf32, #tpu.memory_space<vmem>>, vector<1x192xf32>
    %4 = vector.broadcast %3 : vector<1x192xf32> to vector<8x192xf32>
    %5 = arith.addf %2, %4 : vector<8x192xf32>
    %cst_5 = arith.constant 0.000000e+00 : f32
    %6 = vector.broadcast %cst_5 : f32 to vector<8x192xf32>
    %7 = arith.cmpf oge, %5, %6 : vector<8x192xf32>
    %cst_6 = arith.constant 1.000000e-01 : f32
    %8 = vector.broadcast %cst_6 : f32 to vector<8x192xf32>
    %9 = arith.mulf %8, %5 : vector<8x192xf32>
    %10 = arith.select %7, %5, %9 : vector<8x192xi1>, vector<8x192xf32>
    %11 = vector.extract_strided_slice %10 {offsets = [0, 0], sizes = [8, 64], strides = [1, 1]} : vector<8x192xf32> to vector<8x64xf32>
    %12 = vector.extract_strided_slice %10 {offsets = [0, 64], sizes = [8, 64], strides = [1, 1]} : vector<8x192xf32> to vector<8x64xf32>
    %13 = vector.extract_strided_slice %10 {offsets = [0, 128], sizes = [8, 32], strides = [1, 1]} : vector<8x192xf32> to vector<8x32xf32>
    %14 = vector.extract_strided_slice %10 {offsets = [0, 160], sizes = [8, 32], strides = [1, 1]} : vector<8x192xf32> to vector<8x32xf32>
    %c0_7 = arith.constant 0 : index
    %c0_8 = arith.constant 0 : index
    %15 = vector.load %arg4[%c0_7, %c0_8] : memref<64x64xf32, #tpu.memory_space<vmem>>, vector<64x64xf32>
    %cst_9 = arith.constant dense<0.000000e+00> : vector<8x64xf32>
    %16 = tpu.matmul %12, %15, %cst_9 {dimension_numbers = #tpu.dot_dimension_numbers<[1], [0], [0], [1], [0, 0, 1, 1], [], []>} : vector<8x64xf32>, vector<64x64xf32>, vector<8x64xf32> -> vector<8x64xf32>
    %c0_10 = arith.constant 0 : index
    %c0_11 = arith.constant 0 : index
    %17 = vector.load %arg5[%c0_10, %c0_11] : memref<1x64xf32, #tpu.memory_space<vmem>>, vector<1x64xf32>
    %18 = vector.broadcast %17 : vector<1x64xf32> to vector<8x64xf32>
    %19 = arith.addf %16, %18 : vector<8x64xf32>
    %cst_12 = arith.constant dense<0.000000e+00> : vector<8x8xf32>
    %20 = tpu.matmul %19, %11, %cst_12 {dimension_numbers = #tpu.dot_dimension_numbers<[1], [1], [0], [0], [0, 0, 1, 0], [], []>} : vector<8x64xf32>, vector<8x64xf32>, vector<8x8xf32> -> vector<8x8xf32>
    %c0_13 = arith.constant 0 : index
    %c0_14 = arith.constant 0 : index
    %21 = vector.load %arg6[%c0_13, %c0_14] : memref<64x1xf32, #tpu.memory_space<vmem>>, vector<64x1xf32>
    %cst_15 = arith.constant dense<0.000000e+00> : vector<8x1xf32>
    %22 = tpu.matmul %12, %21, %cst_15 {dimension_numbers = #tpu.dot_dimension_numbers<[1], [0], [0], [1], [0, 0, 1, 1], [], []>} : vector<8x64xf32>, vector<64x1xf32>, vector<8x1xf32> -> vector<8x1xf32>
    %c0_16 = arith.constant 0 : index
    %c0_17 = arith.constant 0 : index
    %23 = vector.load %arg7[%c0_16, %c0_17] : memref<1x1xf32, #tpu.memory_space<vmem>>, vector<1x1xf32>
    %24 = vector.broadcast %23 : vector<1x1xf32> to vector<8x1xf32>
    %25 = arith.addf %22, %24 : vector<8x1xf32>
    %26 = vector.broadcast %25 : vector<8x1xf32> to vector<8x8xf32>
    %27 = arith.addf %20, %26 : vector<8x8xf32>
    %c0_18 = arith.constant 0 : index
    %c0_19 = arith.constant 0 : index
    %c0_20 = arith.constant 0 : index
    %28 = vector.load %arg12[%c0_18, %c0_19, %c0_20] : memref<1x8x8xf32, #tpu.memory_space<vmem>>, vector<1x8x8xf32>
    %29 = vector.shape_cast %28 : vector<1x8x8xf32> to vector<8x8xf32>
    %30 = vector.shape_cast %27 : vector<8x8xf32> to vector<1x8x8xf32>
    tpu.vector_store %arg12[%c0_18, %c0_19, %c0_20], %30 {strides = array<i32>} : memref<1x8x8xf32, #tpu.memory_space<vmem>>, vector<1x8x8xf32>,
    %c0_21 = arith.constant 0 : index
    %c0_22 = arith.constant 0 : index
    %31 = vector.load %arg8[%c0_21, %c0_22] : memref<32x256xf32, #tpu.memory_space<vmem>>, vector<32x256xf32>
    %cst_23 = arith.constant dense<0.000000e+00> : vector<8x256xf32>
    %32 = tpu.matmul %14, %31, %cst_23 {dimension_numbers = #tpu.dot_dimension_numbers<[1], [0], [0], [1], [0, 0, 1, 1], [], []>} : vector<8x32xf32>, vector<32x256xf32>, vector<8x256xf32> -> vector<8x256xf32>
    %c0_24 = arith.constant 0 : index
    %c0_25 = arith.constant 0 : index
    %33 = vector.load %arg9[%c0_24, %c0_25] : memref<1x256xf32, #tpu.memory_space<vmem>>, vector<1x256xf32>
    %34 = vector.broadcast %33 : vector<1x256xf32> to vector<8x256xf32>
    %35 = arith.addf %32, %34 : vector<8x256xf32>
    %c0_26 = arith.constant 0 : index
    %c0_27 = arith.constant 0 : index
    %36 = vector.load %arg10[%c0_26, %c0_27] : memref<32x8xf32, #tpu.memory_space<vmem>>, vector<32x8xf32>
    %cst_28 = arith.constant dense<0.000000e+00> : vector<8x8xf32>
    %37 = tpu.matmul %14, %36, %cst_28 {dimension_numbers = #tpu.dot_dimension_numbers<[1], [0], [0], [1], [0, 0, 1, 1], [], []>} : vector<8x32xf32>, vector<32x8xf32>, vector<8x8xf32> -> vector<8x8xf32>
    %c0_29 = arith.constant 0 : index
    %c0_30 = arith.constant 0 : index
    %38 = vector.load %arg11[%c0_29, %c0_30] : memref<1x8xf32, #tpu.memory_space<vmem>>, vector<1x8xf32>
    %39 = vector.broadcast %38 : vector<1x8xf32> to vector<8x8xf32>
    %40 = arith.addf %37, %39 : vector<8x8xf32>
    %41 = tpu.transpose %13, [1, 0] : vector<8x32xf32> -> vector<32x8xf32>
    %42 = vector.extract_strided_slice %35 {offsets = [0, 0], sizes = [8, 32], strides = [1, 1]} : vector<8x256xf32> to vector<8x32xf32>
    %cst_31 = arith.constant dense<0.000000e+00> : vector<8x8xf32>
    %43 = tpu.matmul %42, %41, %cst_31 {dimension_numbers = #tpu.dot_dimension_numbers<[1], [0], [0], [1], [0, 0, 1, 1], [], []>} : vector<8x32xf32>, vector<32x8xf32>, vector<8x8xf32> -> vector<8x8xf32>
    %44 = vector.extract_strided_slice %40 {offsets = [0, 0], sizes = [8, 1], strides = [1, 1]} : vector<8x8xf32> to vector<8x1xf32>
    %45 = vector.broadcast %44 : vector<8x1xf32> to vector<8x8xf32>
    %46 = arith.addf %43, %45 : vector<8x8xf32>
    %c0_32 = arith.constant 0 : index
    %c0_33 = arith.constant 0 : index
    %c0_34 = arith.constant 0 : index
    %47 = vector.load %arg13[%c0_32, %c0_33, %c0_34] : memref<1x8x64xf32, #tpu.memory_space<vmem>>, vector<1x8x8xf32>
    %48 = vector.shape_cast %47 : vector<1x8x8xf32> to vector<8x8xf32>
    %49 = vector.shape_cast %46 : vector<8x8xf32> to vector<1x8x8xf32>
    tpu.vector_store %arg13[%c0_32, %c0_33, %c0_34], %49 {strides = array<i32>} : memref<1x8x64xf32, #tpu.memory_space<vmem>>, vector<1x8x8xf32>,
    %50 = vector.extract_strided_slice %35 {offsets = [0, 32], sizes = [8, 32], strides = [1, 1]} : vector<8x256xf32> to vector<8x32xf32>
    %cst_35 = arith.constant dense<0.000000e+00> : vector<8x8xf32>
    %51 = tpu.matmul %50, %41, %cst_35 {dimension_numbers = #tpu.dot_dimension_numbers<[1], [0], [0], [1], [0, 0, 1, 1], [], []>} : vector<8x32xf32>, vector<32x8xf32>, vector<8x8xf32> -> vector<8x8xf32>
    %52 = vector.extract_strided_slice %40 {offsets = [0, 1], sizes = [8, 1], strides = [1, 1]} : vector<8x8xf32> to vector<8x1xf32>
    %53 = vector.broadcast %52 : vector<8x1xf32> to vector<8x8xf32>
    %54 = arith.addf %51, %53 : vector<8x8xf32>
    %c0_36 = arith.constant 0 : index
    %c0_37 = arith.constant 0 : index
    %c8 = arith.constant 8 : index
    %55 = vector.load %arg13[%c0_36, %c0_37, %c8] : memref<1x8x64xf32, #tpu.memory_space<vmem>>, vector<1x8x8xf32>
    %56 = vector.shape_cast %55 : vector<1x8x8xf32> to vector<8x8xf32>
    %57 = vector.shape_cast %54 : vector<8x8xf32> to vector<1x8x8xf32>
    tpu.vector_store %arg13[%c0_36, %c0_37, %c8], %57 {strides = array<i32>} : memref<1x8x64xf32, #tpu.memory_space<vmem>>, vector<1x8x8xf32>,
    %58 = vector.extract_strided_slice %35 {offsets = [0, 64], sizes = [8, 32], strides = [1, 1]} : vector<8x256xf32> to vector<8x32xf32>
    %cst_38 = arith.constant dense<0.000000e+00> : vector<8x8xf32>
    %59 = tpu.matmul %58, %41, %cst_38 {dimension_numbers = #tpu.dot_dimension_numbers<[1], [0], [0], [1], [0, 0, 1, 1], [], []>} : vector<8x32xf32>, vector<32x8xf32>, vector<8x8xf32> -> vector<8x8xf32>
    %60 = vector.extract_strided_slice %40 {offsets = [0, 2], sizes = [8, 1], strides = [1, 1]} : vector<8x8xf32> to vector<8x1xf32>
    %61 = vector.broadcast %60 : vector<8x1xf32> to vector<8x8xf32>
    %62 = arith.addf %59, %61 : vector<8x8xf32>
    %c0_39 = arith.constant 0 : index
    %c0_40 = arith.constant 0 : index
    %c16 = arith.constant 16 : index
    %63 = vector.load %arg13[%c0_39, %c0_40, %c16] : memref<1x8x64xf32, #tpu.memory_space<vmem>>, vector<1x8x8xf32>
    %64 = vector.shape_cast %63 : vector<1x8x8xf32> to vector<8x8xf32>
    %65 = vector.shape_cast %62 : vector<8x8xf32> to vector<1x8x8xf32>
    tpu.vector_store %arg13[%c0_39, %c0_40, %c16], %65 {strides = array<i32>} : memref<1x8x64xf32, #tpu.memory_space<vmem>>, vector<1x8x8xf32>,
    %66 = vector.extract_strided_slice %35 {offsets = [0, 96], sizes = [8, 32], strides = [1, 1]} : vector<8x256xf32> to vector<8x32xf32>
    %cst_41 = arith.constant dense<0.000000e+00> : vector<8x8xf32>
    %67 = tpu.matmul %66, %41, %cst_41 {dimension_numbers = #tpu.dot_dimension_numbers<[1], [0], [0], [1], [0, 0, 1, 1], [], []>} : vector<8x32xf32>, vector<32x8xf32>, vector<8x8xf32> -> vector<8x8xf32>
    %68 = vector.extract_strided_slice %40 {offsets = [0, 3], sizes = [8, 1], strides = [1, 1]} : vector<8x8xf32> to vector<8x1xf32>
    %69 = vector.broadcast %68 : vector<8x1xf32> to vector<8x8xf32>
    %70 = arith.addf %67, %69 : vector<8x8xf32>
    %c0_42 = arith.constant 0 : index
    %c0_43 = arith.constant 0 : index
    %c24 = arith.constant 24 : index
    %71 = vector.load %arg13[%c0_42, %c0_43, %c24] : memref<1x8x64xf32, #tpu.memory_space<vmem>>, vector<1x8x8xf32>
    %72 = vector.shape_cast %71 : vector<1x8x8xf32> to vector<8x8xf32>
    %73 = vector.shape_cast %70 : vector<8x8xf32> to vector<1x8x8xf32>
    tpu.vector_store %arg13[%c0_42, %c0_43, %c24], %73 {strides = array<i32>} : memref<1x8x64xf32, #tpu.memory_space<vmem>>, vector<1x8x8xf32>,
    %74 = vector.extract_strided_slice %35 {offsets = [0, 128], sizes = [8, 32], strides = [1, 1]} : vector<8x256xf32> to vector<8x32xf32>
    %cst_44 = arith.constant dense<0.000000e+00> : vector<8x8xf32>
    %75 = tpu.matmul %74, %41, %cst_44 {dimension_numbers = #tpu.dot_dimension_numbers<[1], [0], [0], [1], [0, 0, 1, 1], [], []>} : vector<8x32xf32>, vector<32x8xf32>, vector<8x8xf32> -> vector<8x8xf32>
    %76 = vector.extract_strided_slice %40 {offsets = [0, 4], sizes = [8, 1], strides = [1, 1]} : vector<8x8xf32> to vector<8x1xf32>
    %77 = vector.broadcast %76 : vector<8x1xf32> to vector<8x8xf32>
    %78 = arith.addf %75, %77 : vector<8x8xf32>
    %c0_45 = arith.constant 0 : index
    %c0_46 = arith.constant 0 : index
    %c32 = arith.constant 32 : index
    %79 = vector.load %arg13[%c0_45, %c0_46, %c32] : memref<1x8x64xf32, #tpu.memory_space<vmem>>, vector<1x8x8xf32>
    %80 = vector.shape_cast %79 : vector<1x8x8xf32> to vector<8x8xf32>
    %81 = vector.shape_cast %78 : vector<8x8xf32> to vector<1x8x8xf32>
    tpu.vector_store %arg13[%c0_45, %c0_46, %c32], %81 {strides = array<i32>} : memref<1x8x64xf32, #tpu.memory_space<vmem>>, vector<1x8x8xf32>,
    %82 = vector.extract_strided_slice %35 {offsets = [0, 160], sizes = [8, 32], strides = [1, 1]} : vector<8x256xf32> to vector<8x32xf32>
    %cst_47 = arith.constant dense<0.000000e+00> : vector<8x8xf32>
    %83 = tpu.matmul %82, %41, %cst_47 {dimension_numbers = #tpu.dot_dimension_numbers<[1], [0], [0], [1], [0, 0, 1, 1], [], []>} : vector<8x32xf32>, vector<32x8xf32>, vector<8x8xf32> -> vector<8x8xf32>
    %84 = vector.extract_strided_slice %40 {offsets = [0, 5], sizes = [8, 1], strides = [1, 1]} : vector<8x8xf32> to vector<8x1xf32>
    %85 = vector.broadcast %84 : vector<8x1xf32> to vector<8x8xf32>
    %86 = arith.addf %83, %85 : vector<8x8xf32>
    %c0_48 = arith.constant 0 : index
    %c0_49 = arith.constant 0 : index
    %c40 = arith.constant 40 : index
    %87 = vector.load %arg13[%c0_48, %c0_49, %c40] : memref<1x8x64xf32, #tpu.memory_space<vmem>>, vector<1x8x8xf32>
    %88 = vector.shape_cast %87 : vector<1x8x8xf32> to vector<8x8xf32>
    %89 = vector.shape_cast %86 : vector<8x8xf32> to vector<1x8x8xf32>
    tpu.vector_store %arg13[%c0_48, %c0_49, %c40], %89 {strides = array<i32>} : memref<1x8x64xf32, #tpu.memory_space<vmem>>, vector<1x8x8xf32>,
    %90 = vector.extract_strided_slice %35 {offsets = [0, 192], sizes = [8, 32], strides = [1, 1]} : vector<8x256xf32> to vector<8x32xf32>
    %cst_50 = arith.constant dense<0.000000e+00> : vector<8x8xf32>
    %91 = tpu.matmul %90, %41, %cst_50 {dimension_numbers = #tpu.dot_dimension_numbers<[1], [0], [0], [1], [0, 0, 1, 1], [], []>} : vector<8x32xf32>, vector<32x8xf32>, vector<8x8xf32> -> vector<8x8xf32>
    %92 = vector.extract_strided_slice %40 {offsets = [0, 6], sizes = [8, 1], strides = [1, 1]} : vector<8x8xf32> to vector<8x1xf32>
    %93 = vector.broadcast %92 : vector<8x1xf32> to vector<8x8xf32>
    %94 = arith.addf %91, %93 : vector<8x8xf32>
    %c0_51 = arith.constant 0 : index
    %c0_52 = arith.constant 0 : index
    %c48 = arith.constant 48 : index
    %95 = vector.load %arg13[%c0_51, %c0_52, %c48] : memref<1x8x64xf32, #tpu.memory_space<vmem>>, vector<1x8x8xf32>
    %96 = vector.shape_cast %95 : vector<1x8x8xf32> to vector<8x8xf32>
    %97 = vector.shape_cast %94 : vector<8x8xf32> to vector<1x8x8xf32>
    tpu.vector_store %arg13[%c0_51, %c0_52, %c48], %97 {strides = array<i32>} : memref<1x8x64xf32, #tpu.memory_space<vmem>>, vector<1x8x8xf32>,
    %98 = vector.extract_strided_slice %35 {offsets = [0, 224], sizes = [8, 32], strides = [1, 1]} : vector<8x256xf32> to vector<8x32xf32>
    %cst_53 = arith.constant dense<0.000000e+00> : vector<8x8xf32>
    %99 = tpu.matmul %98, %41, %cst_53 {dimension_numbers = #tpu.dot_dimension_numbers<[1], [0], [0], [1], [0, 0, 1, 1], [], []>} : vector<8x32xf32>, vector<32x8xf32>, vector<8x8xf32> -> vector<8x8xf32>
    %100 = vector.extract_strided_slice %40 {offsets = [0, 7], sizes = [8, 1], strides = [1, 1]} : vector<8x8xf32> to vector<8x1xf32>
    %101 = vector.broadcast %100 : vector<8x1xf32> to vector<8x8xf32>
    %102 = arith.addf %99, %101 : vector<8x8xf32>
    %c0_54 = arith.constant 0 : index
    %c0_55 = arith.constant 0 : index
    %c56 = arith.constant 56 : index
    %103 = vector.load %arg13[%c0_54, %c0_55, %c56] : memref<1x8x64xf32, #tpu.memory_space<vmem>>, vector<1x8x8xf32>
    %104 = vector.shape_cast %103 : vector<1x8x8xf32> to vector<8x8xf32>
    %105 = vector.shape_cast %102 : vector<8x8xf32> to vector<1x8x8xf32>
    tpu.vector_store %arg13[%c0_54, %c0_55, %c56], %105 {strides = array<i32>} : memref<1x8x64xf32, #tpu.memory_space<vmem>>, vector<1x8x8xf32>,
    return
  }
  func.func @transform_0(%arg0: i32) -> (i32, i32) {
    %c0_i32 = arith.constant 0 : i32
    %c0_i32_0 = arith.constant 0 : i32
    return %arg0, %c0_i32 : i32, i32
  }
  func.func @transform_1(%arg0: i32) -> (i32, i32) {
    %c0_i32 = arith.constant 0 : i32
    %c0_i32_0 = arith.constant 0 : i32
    %c0_i32_1 = arith.constant 0 : i32
    return %c0_i32, %c0_i32_0 : i32, i32
  }
  func.func @transform_2(%arg0: i32) -> (i32, i32) {
    %c0_i32 = arith.constant 0 : i32
    %c0_i32_0 = arith.constant 0 : i32
    %c0_i32_1 = arith.constant 0 : i32
    return %c0_i32, %c0_i32_0 : i32, i32
  }
  func.func @transform_3(%arg0: i32) -> (i32, i32) {
    %c0_i32 = arith.constant 0 : i32
    %c0_i32_0 = arith.constant 0 : i32
    %c0_i32_1 = arith.constant 0 : i32
    return %c0_i32, %c0_i32_0 : i32, i32
  }
  func.func @transform_4(%arg0: i32) -> (i32, i32) {
    %c0_i32 = arith.constant 0 : i32
    %c0_i32_0 = arith.constant 0 : i32
    %c0_i32_1 = arith.constant 0 : i32
    return %c0_i32, %c0_i32_0 : i32, i32
  }
  func.func @transform_5(%arg0: i32) -> (i32, i32) {
    %c0_i32 = arith.constant 0 : i32
    %c0_i32_0 = arith.constant 0 : i32
    %c0_i32_1 = arith.constant 0 : i32
    return %c0_i32, %c0_i32_0 : i32, i32
  }
  func.func @transform_6(%arg0: i32) -> (i32, i32) {
    %c0_i32 = arith.constant 0 : i32
    %c0_i32_0 = arith.constant 0 : i32
    %c0_i32_1 = arith.constant 0 : i32
    return %c0_i32, %c0_i32_0 : i32, i32
  }
  func.func @transform_7(%arg0: i32) -> (i32, i32) {
    %c0_i32 = arith.constant 0 : i32
    %c0_i32_0 = arith.constant 0 : i32
    %c0_i32_1 = arith.constant 0 : i32
    return %c0_i32, %c0_i32_0 : i32, i32
  }
  func.func @transform_8(%arg0: i32) -> (i32, i32) {
    %c0_i32 = arith.constant 0 : i32
    %c0_i32_0 = arith.constant 0 : i32
    %c0_i32_1 = arith.constant 0 : i32
    return %c0_i32, %c0_i32_0 : i32, i32
  }
  func.func @transform_9(%arg0: i32) -> (i32, i32) {
    %c0_i32 = arith.constant 0 : i32
    %c0_i32_0 = arith.constant 0 : i32
    %c0_i32_1 = arith.constant 0 : i32
    return %c0_i32, %c0_i32_0 : i32, i32
  }
  func.func @transform_10(%arg0: i32) -> (i32, i32) {
    %c0_i32 = arith.constant 0 : i32
    %c0_i32_0 = arith.constant 0 : i32
    %c0_i32_1 = arith.constant 0 : i32
    return %c0_i32, %c0_i32_0 : i32, i32
  }
  func.func @transform_11(%arg0: i32) -> (i32, i32, i32) {
    %c0_i32 = arith.constant 0 : i32
    %c0_i32_0 = arith.constant 0 : i32
    %c0_i32_1 = arith.constant 0 : i32
    return %arg0, %c0_i32, %c0_i32_0 : i32, i32, i32
  }
  func.func @transform_12(%arg0: i32) -> (i32, i32, i32) {
    %c0_i32 = arith.constant 0 : i32
    %c0_i32_0 = arith.constant 0 : i32
    %c0_i32_1 = arith.constant 0 : i32
    return %arg0, %c0_i32, %c0_i32_0 : i32, i32, i32
  }
}

</mosaic_0001>

<llo_original>
// kernel: squeeze.13
$region0: #{squeeze.13}
  %s0 = inlined_call_operand.vmem [shape: f32[1,8,32], index: 0, kind: input, shape index: {}]
  %s1 = inlined_call_operand.vmem [shape: f32[1,256], index: 1, kind: output, shape index: {}]
  $region1: #{squeeze.13} parent=0
    #allocation0 [shape = 'u8[8192]{0}', space=vmem, size = 0x2000, scoped, tag = 'scoped mem for output reshape']
    %s2 = smov 3
    %v3 = vld [vmem:[%s0] ss:$4 sm:%s2]
    %vm4 = vcmask 261120
    %5 = vst.msk [vmem:[#allocation0] ss:$8 sm:$0x3] %vm4, %v3
    %s6 = scalar_lea.vmem %s0, 3
    %s7 = smov 3
    %v8 = vld [vmem:[%s6] ss:$4 sm:%s7]
    %9 = vrot.lane.b32.xlu0 %v8, 96
    %v10 = vpop.permute.xlu0 %9
    %vm11 = vcmask 1048320
    %12 = vst.msk [vmem:[#allocation0] ss:$8 sm:$0x3] %vm11, %v10
    %s13 = scalar_lea.vmem %s0, 2
    %s14 = smov 3
    %v15 = vld [vmem:[%s13] ss:$4 sm:%s14]
    %16 = vrot.lane.b32.xlu0 %v15, 64
    %v17 = vpop.permute.xlu0 %16
    %vm18 = vcmask 785920
    %19 = vst.msk [vmem:[#allocation0] ss:$8 sm:$0x3] %vm18, %v17
    %s20 = scalar_lea.vmem %s0, 1
    %s21 = smov 3
    %v22 = vld [vmem:[%s20] ss:$4 sm:%s21]
    %23 = vrot.lane.b32.xlu0 %v22, 32
    %v24 = vpop.permute.xlu0 %23
    %vm25 = vcmask 523520
    %26 = vst.msk [vmem:[#allocation0] ss:$8 sm:$0x3] %vm25, %v24
    %s28 = sshllo.u32 0, 1
    %v30 = vld [vmem:[#allocation0] sm:%s28]
    %s31 = sshllo.u32 0, 1
    %32 = vst [vmem:[%s1] sm:%s31] %v30
    %s33 = scalar_lea.vmem [#allocation0], 8
    %v34 = vld [vmem:[%s33] sm:%s28]
    %s35 = sshllo.u32 0, 1
    %s36 = scalar_lea.vmem %s1, 1
    %37 = vst [vmem:[%s36] sm:%s35] %v34

// kernel: biaffine_parser_forward.1
$region0: #{biaffine_parser_forward.1}
  #allocation0 [shape = 'u32[]', space=smem, size = 0x4, offset = 0x4, fixed_abs, tag = 'smem constant byte address 0x4 - core index']
  #allocation1 [shape = 'u32[144,128]{1,0:T(1,128)}', space=vmem, size = 0x12000, scoped, tag = 'internal scratch']
  #allocation2 [shape = 'f32[1,1]{1,0:T(1,128)S(1)}', space=vmem, size = 0x200, scoped, tag = 'scoped memory for biaffine_parser_forward.1']
  %s0 = inlined_call_operand.vmem [shape: f32[16,32], index: 0, kind: input, shape index: {}]
  %s1 = inlined_call_operand.vmem [shape: f32[32,192], index: 1, kind: input, shape index: {}]
  %s2 = inlined_call_operand.vmem [shape: f32[1,192], index: 2, kind: input, shape index: {}]
  %s3 = inlined_call_operand.vmem [shape: f32[64,64], index: 3, kind: input, shape index: {}]
  %s4 = inlined_call_operand.vmem [shape: f32[1,64], index: 4, kind: input, shape index: {}]
  %s5 = inlined_call_operand.vmem [shape: f32[64,1], index: 5, kind: input, shape index: {}]
  %s6 = inlined_call_operand.<no memory space> [shape: f32[1,1], index: 6, kind: input, shape index: {}]
  %s7 = inlined_call_operand.vmem [shape: f32[32,256], index: 7, kind: input, shape index: {}]
  %s8 = inlined_call_operand.vmem [shape: f32[1,256], index: 8, kind: input, shape index: {}]
  %s9 = inlined_call_operand.vmem [shape: f32[32,8], index: 9, kind: input, shape index: {}]
  %s10 = inlined_call_operand.vmem [shape: f32[1,8], index: 10, kind: input, shape index: {}]
  %s11 = inlined_call_operand.vmem [shape: f32[2,8,8], index: 11, kind: output, shape index: {0}]
  %s12 = inlined_call_operand.vmem [shape: f32[2,8,64], index: 12, kind: output, shape index: {1}]
  %13 = xla_tuple %s11, %s12
  %s14 = sld [smem:[#allocation0]]
  $region85: #{biaffine_parser_forward.1} parent=0
    _
  %s16 = ssub.s32 1, %s14
  %s17 = scalar_select 0, %s16, %s14
  %v18 = vstv %s6
  %19 = vst [vmem:[#allocation2] sm:$0x1] %v18
  loop: start=0, step=1, limit=4
  $region2: #{biaffine_parser_forward.1} parent=0 // loop_pre_header
    _
  $region3: #{biaffine_parser_forward.1} parent=0 // loop_header
    %s21 = sphi 0, %s25
    %p22 = scmp.ge.s32.totalorder %s21, 4
    %s31 = sphi 0, %s33
    %s34 = sphi 0, %s31
    %s35 = sphi 0, %s34
    %s51 = sphi 0, %s35
    %s55 = sphi 0, %s55
    %s57 = sphi 0, %s55
    %s58 = sphi 0, %s57
    %s72 = sphi 0, %s58
    %s76 = sphi 0, %s76
    %s78 = sphi 0, %s76
    %s79 = sphi 0, %s78
    %s93 = sphi 0, %s79
    %s97 = sphi 0, %s97
    %s99 = sphi 0, %s97
    %s100 = sphi 0, %s99
    %s114 = sphi 0, %s100
    %s118 = sphi 0, %s118
    %s120 = sphi 0, %s118
    %s121 = sphi 0, %s120
    %s135 = sphi 0, %s121
    %s139 = sphi 0, %s139
    %s141 = sphi 0, %s139
    %s142 = sphi 0, %s141
    %s156 = sphi 0, %s142
    %s160 = sphi 0, %s160
    %s162 = sphi 0, %s160
    %s163 = sphi 0, %s162
    %s177 = sphi 0, %s163
    %s181 = sphi 0, %s181
    %s183 = sphi 0, %s181
    %s184 = sphi 0, %s183
    %s198 = sphi 0, %s184
    %s202 = sphi 0, %s202
    %s204 = sphi 0, %s202
    %s205 = sphi 0, %s204
    %s219 = sphi 0, %s205
    %s223 = sphi 0, %s223
    %s225 = sphi 0, %s223
    %s226 = sphi 0, %s225
    %s240 = sphi 0, %s226
    %s244 = sphi 0, %s244
    %s246 = sphi 0, %s244
    %s247 = sphi 0, %s246
    %s261 = sphi 0, %s247
    %s267 = sphi 0, %s269
    %s270 = sphi 0, %s267
    %s271 = sphi 0, %s270
    %s287 = sphi 0, %s271
    %s293 = sphi 0, %s295
    %s296 = sphi 0, %s293
    %s297 = sphi 0, %s296
    %s313 = sphi 0, %s297
  $region4: #{biaffine_parser_forward.1} parent=0 // loop_header_branch
    %24 = sbr.rel (%p22) target = $region8
  $region5: #{biaffine_parser_forward.1} parent=0 // loop_body
    %s26 = ssub.s32 %s21, 1
    %s27 = ssub.s32 %s21, 2
    %s28 = sadd.s32 %s21, 1
    %s29 = ssub.s32 %s21, %s28
    %p30 = scmp.eq.s32.totalorder %s29, 0
    %s32 = sadd.s32 %s31, 1
    %s33 = scalar_select %p30, %s31, %s32
    %p36 = pneg %p30
    %p37 = scmp.eq.s32.totalorder %s21, 1
    %p38 = por %p36, %p37
    %p39 = scmp.ne.s32.totalorder %s31, %s34
    %p40 = scmp.eq.s32.totalorder %s21, 0
    %p41 = por %p39, %p40
    %p42 = scmp.ne.s32.totalorder %s31, %s34
    %p43 = scmp.eq.s32.totalorder %s26, 1
    %p44 = por %p42, %p43
    %p45 = scmp.ne.s32.totalorder %s34, %s35
    %p46 = scmp.eq.s32.totalorder %s26, 0
    %p47 = por %p45, %p46
    %p48 = scmp.ne.s32.totalorder %s34, %s35
    %p49 = scmp.eq.s32.totalorder %s27, 1
    %p50 = por %p48, %p49
    %p52 = scmp.ne.s32.totalorder %s35, %s51
    %p53 = scmp.eq.s32.totalorder %s27, 0
    %p54 = por %p52, %p53
    %s56 = sadd.s32 %s55, 1
    %p59 = scmp.eq.s32.totalorder %s21, 1
    %p60 = scmp.ne.s32.totalorder %s55, %s57
    %p61 = scmp.eq.s32.totalorder %s21, 0
    %p62 = por %p60, %p61
    %p63 = scmp.ne.s32.totalorder %s55, %s57
    %p64 = scmp.eq.s32.totalorder %s26, 1
    %p65 = por %p63, %p64
    %p66 = scmp.ne.s32.totalorder %s57, %s58
    %p67 = scmp.eq.s32.totalorder %s26, 0
    %p68 = por %p66, %p67
    %p69 = scmp.ne.s32.totalorder %s57, %s58
    %p70 = scmp.eq.s32.totalorder %s27, 1
    %p71 = por %p69, %p70
    %p73 = scmp.ne.s32.totalorder %s58, %s72
    %p74 = scmp.eq.s32.totalorder %s27, 0
    %p75 = por %p73, %p74
    %s77 = sadd.s32 %s76, 1
    %p80 = scmp.eq.s32.totalorder %s21, 1
    %p81 = scmp.ne.s32.totalorder %s76, %s78
    %p82 = scmp.eq.s32.totalorder %s21, 0
    %p83 = por %p81, %p82
    %p84 = scmp.ne.s32.totalorder %s76, %s78
    %p85 = scmp.eq.s32.totalorder %s26, 1
    %p86 = por %p84, %p85
    %p87 = scmp.ne.s32.totalorder %s78, %s79
    %p88 = scmp.eq.s32.totalorder %s26, 0
    %p89 = por %p87, %p88
    %p90 = scmp.ne.s32.totalorder %s78, %s79
    %p91 = scmp.eq.s32.totalorder %s27, 1
    %p92 = por %p90, %p91
    %p94 = scmp.ne.s32.totalorder %s79, %s93
    %p95 = scmp.eq.s32.totalorder %s27, 0
    %p96 = por %p94, %p95
    %s98 = sadd.s32 %s97, 1
    %p101 = scmp.eq.s32.totalorder %s21, 1
    %p102 = scmp.ne.s32.totalorder %s97, %s99
    %p103 = scmp.eq.s32.totalorder %s21, 0
    %p104 = por %p102, %p103
    %p105 = scmp.ne.s32.totalorder %s97, %s99
    %p106 = scmp.eq.s32.totalorder %s26, 1
    %p107 = por %p105, %p106
    %p108 = scmp.ne.s32.totalorder %s99, %s100
    %p109 = scmp.eq.s32.totalorder %s26, 0
    %p110 = por %p108, %p109
    %p111 = scmp.ne.s32.totalorder %s99, %s100
    %p112 = scmp.eq.s32.totalorder %s27, 1
    %p113 = por %p111, %p112
    %p115 = scmp.ne.s32.totalorder %s100, %s114
    %p116 = scmp.eq.s32.totalorder %s27, 0
    %p117 = por %p115, %p116
    %s119 = sadd.s32 %s118, 1
    %p122 = scmp.eq.s32.totalorder %s21, 1
    %p123 = scmp.ne.s32.totalorder %s118, %s120
    %p124 = scmp.eq.s32.totalorder %s21, 0
    %p125 = por %p123, %p124
    %p126 = scmp.ne.s32.totalorder %s118, %s120
    %p127 = scmp.eq.s32.totalorder %s26, 1
    %p128 = por %p126, %p127
    %p129 = scmp.ne.s32.totalorder %s120, %s121
    %p130 = scmp.eq.s32.totalorder %s26, 0
    %p131 = por %p129, %p130
    %p132 = scmp.ne.s32.totalorder %s120, %s121
    %p133 = scmp.eq.s32.totalorder %s27, 1
    %p134 = por %p132, %p133
    %p136 = scmp.ne.s32.totalorder %s121, %s135
    %p137 = scmp.eq.s32.totalorder %s27, 0
    %p138 = por %p136, %p137
    %s140 = sadd.s32 %s139, 1
    %p143 = scmp.eq.s32.totalorder %s21, 1
    %p144 = scmp.ne.s32.totalorder %s139, %s141
    %p145 = scmp.eq.s32.totalorder %s21, 0
    %p146 = por %p144, %p145
    %p147 = scmp.ne.s32.totalorder %s139, %s141
    %p148 = scmp.eq.s32.totalorder %s26, 1
    %p149 = por %p147, %p148
    %p150 = scmp.ne.s32.totalorder %s141, %s142
    %p151 = scmp.eq.s32.totalorder %s26, 0
    %p152 = por %p150, %p151
    %p153 = scmp.ne.s32.totalorder %s141, %s142
    %p154 = scmp.eq.s32.totalorder %s27, 1
    %p155 = por %p153, %p154
    %p157 = scmp.ne.s32.totalorder %s142, %s156
    %p158 = scmp.eq.s32.totalorder %s27, 0
    %p159 = por %p157, %p158
    %s161 = sadd.s32 %s160, 1
    %p164 = scmp.eq.s32.totalorder %s21, 1
    %p165 = scmp.ne.s32.totalorder %s160, %s162
    %p166 = scmp.eq.s32.totalorder %s21, 0
    %p167 = por %p165, %p166
    %p168 = scmp.ne.s32.totalorder %s160, %s162
    %p169 = scmp.eq.s32.totalorder %s26, 1
    %p170 = por %p168, %p169
    %p171 = scmp.ne.s32.totalorder %s162, %s163
    %p172 = scmp.eq.s32.totalorder %s26, 0
    %p173 = por %p171, %p172
    %p174 = scmp.ne.s32.totalorder %s162, %s163
    %p175 = scmp.eq.s32.totalorder %s27, 1
    %p176 = por %p174, %p175
    %p178 = scmp.ne.s32.totalorder %s163, %s177
    %p179 = scmp.eq.s32.totalorder %s27, 0
    %p180 = por %p178, %p179
    %s182 = sadd.s32 %s181, 1
    %p185 = scmp.eq.s32.totalorder %s21, 1
    %p186 = scmp.ne.s32.totalorder %s181, %s183
    %p187 = scmp.eq.s32.totalorder %s21, 0
    %p188 = por %p186, %p187
    %p189 = scmp.ne.s32.totalorder %s181, %s183
    %p190 = scmp.eq.s32.totalorder %s26, 1
    %p191 = por %p189, %p190
    %p192 = scmp.ne.s32.totalorder %s183, %s184
    %p193 = scmp.eq.s32.totalorder %s26, 0
    %p194 = por %p192, %p193
    %p195 = scmp.ne.s32.totalorder %s183, %s184
    %p196 = scmp.eq.s32.totalorder %s27, 1
    %p197 = por %p195, %p196
    %p199 = scmp.ne.s32.totalorder %s184, %s198
    %p200 = scmp.eq.s32.totalorder %s27, 0
    %p201 = por %p199, %p200
    %s203 = sadd.s32 %s202, 1
    %p206 = scmp.eq.s32.totalorder %s21, 1
    %p207 = scmp.ne.s32.totalorder %s202, %s204
    %p208 = scmp.eq.s32.totalorder %s21, 0
    %p209 = por %p207, %p208
    %p210 = scmp.ne.s32.totalorder %s202, %s204
    %p211 = scmp.eq.s32.totalorder %s26, 1
    %p212 = por %p210, %p211
    %p213 = scmp.ne.s32.totalorder %s204, %s205
    %p214 = scmp.eq.s32.totalorder %s26, 0
    %p215 = por %p213, %p214
    %p216 = scmp.ne.s32.totalorder %s204, %s205
    %p217 = scmp.eq.s32.totalorder %s27, 1
    %p218 = por %p216, %p217
    %p220 = scmp.ne.s32.totalorder %s205, %s219
    %p221 = scmp.eq.s32.totalorder %s27, 0
    %p222 = por %p220, %p221
    %s224 = sadd.s32 %s223, 1
    %p227 = scmp.eq.s32.totalorder %s21, 1
    %p228 = scmp.ne.s32.totalorder %s223, %s225
    %p229 = scmp.eq.s32.totalorder %s21, 0
    %p230 = por %p228, %p229
    %p231 = scmp.ne.s32.totalorder %s223, %s225
    %p232 = scmp.eq.s32.totalorder %s26, 1
    %p233 = por %p231, %p232
    %p234 = scmp.ne.s32.totalorder %s225, %s226
    %p235 = scmp.eq.s32.totalorder %s26, 0
    %p236 = por %p234, %p235
    %p237 = scmp.ne.s32.totalorder %s225, %s226
    %p238 = scmp.eq.s32.totalorder %s27, 1
    %p239 = por %p237, %p238
    %p241 = scmp.ne.s32.totalorder %s226, %s240
    %p242 = scmp.eq.s32.totalorder %s27, 0
    %p243 = por %p241, %p242
    %s245 = sadd.s32 %s244, 1
    %p248 = scmp.eq.s32.totalorder %s21, 1
    %p249 = scmp.ne.s32.totalorder %s244, %s246
    %p250 = scmp.eq.s32.totalorder %s21, 0
    %p251 = por %p249, %p250
    %p252 = scmp.ne.s32.totalorder %s244, %s246
    %p253 = scmp.eq.s32.totalorder %s26, 1
    %p254 = por %p252, %p253
    %p255 = scmp.ne.s32.totalorder %s246, %s247
    %p256 = scmp.eq.s32.totalorder %s26, 0
    %p257 = por %p255, %p256
    %p258 = scmp.ne.s32.totalorder %s246, %s247
    %p259 = scmp.eq.s32.totalorder %s27, 1
    %p260 = por %p258, %p259
    %p262 = scmp.ne.s32.totalorder %s247, %s261
    %p263 = scmp.eq.s32.totalorder %s27, 0
    %p264 = por %p262, %p263
    %s265 = ssub.s32 %s21, %s28
    %p266 = scmp.eq.s32.totalorder %s265, 0
    %s268 = sadd.s32 %s267, 1
    %s269 = scalar_select %p266, %s267, %s268
    %p272 = pneg %p266
    %p273 = scmp.eq.s32.totalorder %s21, 1
    %p274 = por %p272, %p273
    %p275 = scmp.ne.s32.totalorder %s267, %s270
    %p276 = scmp.eq.s32.totalorder %s21, 0
    %p277 = por %p275, %p276
    %p278 = scmp.ne.s32.totalorder %s267, %s270
    %p279 = scmp.eq.s32.totalorder %s26, 1
    %p280 = por %p278, %p279
    %p281 = scmp.ne.s32.totalorder %s270, %s271
    %p282 = scmp.eq.s32.totalorder %s26, 0
    %p283 = por %p281, %p282
    %p284 = scmp.ne.s32.totalorder %s270, %s271
    %p285 = scmp.eq.s32.totalorder %s27, 1
    %p286 = por %p284, %p285
    %p288 = scmp.ne.s32.totalorder %s271, %s287
    %p289 = scmp.eq.s32.totalorder %s27, 0
    %p290 = por %p288, %p289
    %s291 = ssub.s32 %s21, %s28
    %p292 = scmp.eq.s32.totalorder %s291, 0
    %s294 = sadd.s32 %s293, 1
    %s295 = scalar_select %p292, %s293, %s294
    %p298 = pneg %p292
    %p299 = scmp.eq.s32.totalorder %s21, 1
    %p300 = por %p298, %p299
    %p301 = scmp.ne.s32.totalorder %s293, %s296
    %p302 = scmp.eq.s32.totalorder %s21, 0
    %p303 = por %p301, %p302
    %p304 = scmp.ne.s32.totalorder %s293, %s296
    %p305 = scmp.eq.s32.totalorder %s26, 1
    %p306 = por %p304, %p305
    %p307 = scmp.ne.s32.totalorder %s296, %s297
    %p308 = scmp.eq.s32.totalorder %s26, 0
    %p309 = por %p307, %p308
    %p310 = scmp.ne.s32.totalorder %s296, %s297
    %p311 = scmp.eq.s32.totalorder %s27, 1
    %p312 = por %p310, %p311
    %p314 = scmp.ne.s32.totalorder %s297, %s313
    %p315 = scmp.eq.s32.totalorder %s27, 0
    %p316 = por %p314, %p315
    %p317 = scmp.le.s32.totalorder 1, %s21
    %p318 = scmp.lt.s32.totalorder %s21, 3
    %p319 = pnand %p317, %p318
    %p320 = pneg %p319
    // Predicated region
    $region9: #{biaffine_parser_forward.1} parent=5 // pred_check
      _
    $region10: #{biaffine_parser_forward.1} parent=5 // pred_check_branch
      %322 = sbr.rel (%p319) target = $region12
    $region11: #{biaffine_parser_forward.1} parent=5 // pred_region
      %s323 = ssub.s32 %s21, 1
      // Predicated region
      $region13: #{biaffine_parser_forward.1} parent=11 // pred_check
        %p324 = pneg %p68
      $region14: #{biaffine_parser_forward.1} parent=11 // pred_check_branch
        %326 = sbr.rel (%p324) target = $region16
      $region15: #{biaffine_parser_forward.1} parent=11 // pred_region
        _
      $region16: #{biaffine_parser_forward.1} parent=11 // pred_fallthru
        _
      // Predicated region
      $region17: #{biaffine_parser_forward.1} parent=11 // pred_check
        %p327 = pneg %p89
      $region18: #{biaffine_parser_forward.1} parent=11 // pred_check_branch
        %329 = sbr.rel (%p327) target = $region20
      $region19: #{biaffine_parser_forward.1} parent=11 // pred_region
        _
      $region20: #{biaffine_parser_forward.1} parent=11 // pred_fallthru
        _
      // Predicated region
      $region21: #{biaffine_parser_forward.1} parent=11 // pred_check
        %p330 = pneg %p110
      $region22: #{biaffine_parser_forward.1} parent=11 // pred_check_branch
        %332 = sbr.rel (%p330) target = $region24
      $region23: #{biaffine_parser_forward.1} parent=11 // pred_region
        _
      $region24: #{biaffine_parser_forward.1} parent=11 // pred_fallthru
        _
      // Predicated region
      $region25: #{biaffine_parser_forward.1} parent=11 // pred_check
        %p333 = pneg %p131
      $region26: #{biaffine_parser_forward.1} parent=11 // pred_check_branch
        %335 = sbr.rel (%p333) target = $region28
      $region27: #{biaffine_parser_forward.1} parent=11 // pred_region
        _
      $region28: #{biaffine_parser_forward.1} parent=11 // pred_fallthru
        _
      // Predicated region
      $region29: #{biaffine_parser_forward.1} parent=11 // pred_check
        %p336 = pneg %p152
      $region30: #{biaffine_parser_forward.1} parent=11 // pred_check_branch
        %338 = sbr.rel (%p336) target = $region32
      $region31: #{biaffine_parser_forward.1} parent=11 // pred_region
        _
      $region32: #{biaffine_parser_forward.1} parent=11 // pred_fallthru
        _
      // Predicated region
      $region33: #{biaffine_parser_forward.1} parent=11 // pred_check
        %p339 = pneg %p173
      $region34: #{biaffine_parser_forward.1} parent=11 // pred_check_branch
        %341 = sbr.rel (%p339) target = $region36
      $region35: #{biaffine_parser_forward.1} parent=11 // pred_region
        _
      $region36: #{biaffine_parser_forward.1} parent=11 // pred_fallthru
        _
      // Predicated region
      $region37: #{biaffine_parser_forward.1} parent=11 // pred_check
        %p342 = pneg %p194
      $region38: #{biaffine_parser_forward.1} parent=11 // pred_check_branch
        %344 = sbr.rel (%p342) target = $region40
      $region39: #{biaffine_parser_forward.1} parent=11 // pred_region
        _
      $region40: #{biaffine_parser_forward.1} parent=11 // pred_fallthru
        _
      // Predicated region
      $region41: #{biaffine_parser_forward.1} parent=11 // pred_check
        %p345 = pneg %p215
      $region42: #{biaffine_parser_forward.1} parent=11 // pred_check_branch
        %347 = sbr.rel (%p345) target = $region44
      $region43: #{biaffine_parser_forward.1} parent=11 // pred_region
        _
      $region44: #{biaffine_parser_forward.1} parent=11 // pred_fallthru
        _
      // Predicated region
      $region45: #{biaffine_parser_forward.1} parent=11 // pred_check
        %p348 = pneg %p236
      $region46: #{biaffine_parser_forward.1} parent=11 // pred_check_branch
        %350 = sbr.rel (%p348) target = $region48
      $region47: #{biaffine_parser_forward.1} parent=11 // pred_region
        _
      $region48: #{biaffine_parser_forward.1} parent=11 // pred_fallthru
        _
      // Predicated region
      $region49: #{biaffine_parser_forward.1} parent=11 // pred_check
        %p351 = pneg %p257
      $region50: #{biaffine_parser_forward.1} parent=11 // pred_check_branch
        %353 = sbr.rel (%p351) target = $region52
      $region51: #{biaffine_parser_forward.1} parent=11 // pred_region
        _
      $region52: #{biaffine_parser_forward.1} parent=11 // pred_fallthru
        _
    $region12: #{biaffine_parser_forward.1} parent=5 // pred_fallthru
      _
    %p354 = scmp.lt.s32.totalorder %s21, 2
    // Predicated region
    $region53: #{biaffine_parser_forward.1} parent=5 // pred_check
      %p355 = pneg %p354
    $region54: #{biaffine_parser_forward.1} parent=5 // pred_check_branch
      %357 = sbr.rel (%p355) target = $region56
    $region55: #{biaffine_parser_forward.1} parent=5 // pred_region
      // Predicated region
      $region57: #{biaffine_parser_forward.1} parent=55 // pred_check
        %p358 = pneg %p41
      $region58: #{biaffine_parser_forward.1} parent=55 // pred_check_branch
        %360 = sbr.rel (%p358) target = $region60
      $region59: #{biaffine_parser_forward.1} parent=55 // pred_region
        %p361 = scmp.lt.s32.totalorder %s21, 1
        %s362 = scalar_select %p361, %s21, 1
        %s363 = smul.addr %s362, 8
        %s364 = scalar_lea.vmem %s0, %s363
      $region60: #{biaffine_parser_forward.1} parent=55 // pred_fallthru
        _
    $region56: #{biaffine_parser_forward.1} parent=5 // pred_fallthru
      _
    %p365 = scmp.le.s32.totalorder 1, %s21
    %p366 = scmp.lt.s32.totalorder %s21, 3
    %p367 = pnand %p365, %p366
    %p368 = pneg %p367
    // Predicated region
    $region61: #{biaffine_parser_forward.1} parent=5 // pred_check
      _
    $region62: #{biaffine_parser_forward.1} parent=5 // pred_check_branch
      %370 = sbr.rel (%p367) target = $region64
    $region63: #{biaffine_parser_forward.1} parent=5 // pred_region
      %s371 = ssub.s32 %s21, 1
      %p372 = scmp.lt.s32.totalorder %s26, 1
      %s373 = scalar_select %p372, %s26, 1
      %s374 = smul.addr %s373, 8
      %s375 = scalar_lea.vmem %s0, %s374
      %p376 = pneg %p47
      %p377 = pneg %p44
      %p378 = pneg %p68
      %p379 = pneg %p65
      %p380 = pneg %p89
      %p381 = pneg %p86
      %p382 = pneg %p110
      %p383 = pneg %p107
      %p384 = pneg %p131
      %p385 = pneg %p128
      %p386 = pneg %p152
      %p387 = pneg %p149
      %p388 = pneg %p173
      %p389 = pneg %p170
      %p390 = pneg %p194
      %p391 = pneg %p191
      %p392 = pneg %p215
      %p393 = pneg %p212
      %p394 = pneg %p236
      %p395 = pneg %p233
      %p396 = pneg %p257
      %p397 = pneg %p254
      %p398 = pneg %p283
      %p399 = pneg %p280
      %p400 = scmp.lt.s32.totalorder %s26, 1
      %s401 = scalar_select %p400, %s26, 1
      %s402 = smul.addr %s401, 8
      %s403 = scalar_lea.vmem %s11, %s402
      %p404 = pneg %p309
      %p405 = pneg %p306
      %p406 = scmp.lt.s32.totalorder %s26, 1
      %s407 = scalar_select %p406, %s26, 1
      %s408 = smul.addr %s407, 8
      %s409 = scalar_lea.vmem %s12, %s408
      %p410 = scmp.lt.s32.totalorder %s26, 1
      %s411 = scalar_select %p410, %s26, 1
      %s412 = smul.addr %s411, 8
      %s413 = scalar_lea.vmem %s0, %s412
      %p414 = scmp.lt.s32.totalorder %s26, 1
      %s415 = scalar_select %p414, %s26, 1
      %s416 = smul.addr %s415, 8
      %s417 = scalar_lea.vmem %s11, %s416
      %p418 = scmp.lt.s32.totalorder %s26, 1
      %s419 = scalar_select %p418, %s26, 1
      %s420 = smul.addr %s419, 8
      %s421 = scalar_lea.vmem %s12, %s420
      %v422 = vld [vmem:[%s413] sm:$0xff]
      %v423 = vld [vmem:[%s1] sm:$0xff]
      %v424 = vld [vmem:[%s1 + $0x8] sm:$0xff]
      %v425 = vld [vmem:[%s1 + $0x10] sm:$0xff]
      %v426 = vld [vmem:[%s1 + $0x18] sm:$0xff]
      %v427 = vld [vmem:[%s1 + $0x20] sm:$0xff]
      %v428 = vld [vmem:[%s1 + $0x28] sm:$0xff]
      %v429 = vld [vmem:[%s1 + $0x30] sm:$0xff]
      %v430 = vld [vmem:[%s1 + $0x38] sm:$0xff]
      %v431 = vld [vmem:[%s2] sm:$0x3]
      %v433 = vlaneseq
      %v434 = vshrl.u32 %v433, 7
      %v435 = vsub.s32 0, %v434
      %v436 = vrot.slane %v431, %v435
      %v437 = vlaneseq
      %v438 = vshrl.u32 %v437, 7
      %v439 = vsub.s32 1, %v438
      %v440 = vrot.slane %v431, %v439
      %vm443 = vcmask 261120
      %v445 = vsel %vm443, %v422, 0
      %447 = vmatprep.subr.mxu0 %v424
      %448 = vmatpush1.msra.mxu0 %v423
      %449 = vmatprep.subr.mxu0 %v426
      %450 = vmatpush1.msra.mxu0 %v425
      %451 = vmatprep.subr.mxu0 %v428
      %452 = vmatpush1.msra.mxu0 %v427
      %453 = vmatprep.subr.mxu0 %v430
      %454 = vmatpush1.msra.mxu0 %v429
      %455 = vmatprep.subr.mxu0 0.0
      %456 = vmatpush1.msra.mxu0 0.0
      %457 = vmatprep.subr.mxu0 0.0
      %458 = vmatpush1.msra.mxu0 0.0
      %459 = vmatprep.subr.mxu0 0.0
      %460 = vmatpush1.msra.mxu0 0.0
      %461 = vmatprep.subr.mxu0 0.0
      %462 = vmatpush1.msra.mxu0 0.0
      %463 = vmatprep.subr.mxu0 0.0
      %464 = vmatpush1.msra.mxu0 0.0
      %465 = vmatprep.subr.mxu0 0.0
      %466 = vmatpush1.msra.mxu0 0.0
      %467 = vmatprep.subr.mxu0 0.0
      %468 = vmatpush1.msra.mxu0 0.0
      %469 = vmatprep.subr.mxu0 0.0
      %470 = vmatpush1.msra.mxu0 0.0
      %471 = vmatprep.subr.mxu0 0.0
      %472 = vmatpush1.msra.mxu0 0.0
      %473 = vmatprep.subr.mxu0 0.0
      %474 = vmatpush1.msra.mxu0 0.0
      %475 = vmatprep.subr.mxu0 0.0
      %476 = vmatpush1.msra.mxu0 0.0
      %477 = vmatprep.subr.mxu0 0.0
      %478 = vmatpush1.msra.mxu0 0.0
      %479 = vmatprep.subr.mxu0 0.0
      %480 = vmatpush1.msra.mxu0 0.0
      %481 = vmatprep.subr.mxu0 0.0
      %482 = vmatpush1.msra.mxu0 0.0
      %483 = vmatprep.subr.mxu0 0.0
      %484 = vmatpush1.msra.mxu0 0.0
      %485 = vmatprep.subr.mxu0 0.0
      %486 = vmatpush1.msra.mxu0 0.0
      %487 = vmatprep.subr.mxu0 0.0
      %488 = vmatpush1.msra.mxu0 0.0
      %489 = vmatprep.subr.mxu0 0.0
      %490 = vmatpush1.msra.mxu0 0.0
      %491 = vmatprep.subr.mxu0 0.0
      %492 = vmatpush1.msra.mxu0 0.0
      %493 = vmatprep.subr.mxu0 0.0
      %494 = vmatpush1.msra.mxu0 0.0
      %495 = vmatprep.subr.mxu0 0.0
      %496 = vmatpush1.msra.mxu0 0.0
      %497 = vmatprep.subr.mxu0 0.0
      %498 = vmatpush1.msra.mxu0 0.0
      %499 = vmatprep.subr.mxu0 0.0
      %500 = vmatpush1.msra.mxu0 0.0
      %501 = vmatprep.subr.mxu0 0.0
      %502 = vmatpush1.msra.mxu0 0.0
      %503 = vmatprep.subr.mxu0 0.0
      %504 = vmatpush1.msra.mxu0 0.0
      %505 = vmatprep.subr.mxu0 0.0
      %506 = vmatpush1.msra.mxu0 0.0
      %507 = vmatprep.subr.mxu0 0.0
      %508 = vmatpush1.msra.mxu0 0.0
      %509 = vmatprep.subr.mxu0 0.0
      %510 = vmatpush1.msra.mxu0 0.0
      %511 = vmatprep.mubr.f32.mxu0 0.0
      %512 = vmatmul.mubr.f32.gmra.mrb[0].mxu0 %v445
      %v513 = vpop.f32.mrb[0].mxu0
      %v514 = vadd.f32 %v436, %v513
      %v515 = vpop.f32.mrb[0].mxu0
      %v516 = vadd.f32 %v440, %v515
      %517 = vdwg.mxu0
      %vm518 = vcmp.ge.f32.partialorder %v514, 0.0
      %vm519 = vcmp.ge.f32.partialorder %v516, 0.0
      %v520 = vmul.f32 %v514, 0.1
      %v521 = vmul.f32 %v516, 0.1
      %v522 = vsel %vm518, %v514, %v520
      %v523 = vsel %vm519, %v516, %v521
      %v524 = vld [vmem:[%s3] sm:$0xff]
      %v525 = vld [vmem:[%s3 + $0x8] sm:$0xff]
      %v526 = vld [vmem:[%s3 + $0x10] sm:$0xff]
      %v527 = vld [vmem:[%s3 + $0x18] sm:$0xff]
      %v528 = vld [vmem:[%s3 + $0x20] sm:$0xff]
      %v529 = vld [vmem:[%s3 + $0x28] sm:$0xff]
      %v530 = vld [vmem:[%s3 + $0x30] sm:$0xff]
      %v531 = vld [vmem:[%s3 + $0x38] sm:$0xff]
      %v532 = vld [vmem:[%s4] sm:$0x1]
      %v534 = vlaneseq
      %v535 = vshrl.u32 %v534, 7
      %v536 = vsub.s32 0, %v535
      %v537 = vrot.slane %v532, %v536
      %540 = vrot.lane.b32.xlu0 %v522, 64
      %v541 = vpop.permute.xlu0 %540
      %vm542 = vcmask 523264
      %v543 = vsel %vm542, %v541, 0
      %545 = vmatprep.subr.mxu0 0.0
      %546 = vmatpush1.msra.mxu0 %v524
      %547 = vmatprep.subr.mxu0 0.0
      %548 = vmatpush1.msra.mxu0 %v525
      %549 = vmatprep.subr.mxu0 0.0
      %550 = vmatpush1.msra.mxu0 %v526
      %551 = vmatprep.subr.mxu0 0.0
      %552 = vmatpush1.msra.mxu0 %v527
      %553 = vmatprep.subr.mxu0 0.0
      %554 = vmatpush1.msra.mxu0 %v528
      %555 = vmatprep.subr.mxu0 0.0
      %556 = vmatpush1.msra.mxu0 %v529
      %557 = vmatprep.subr.mxu0 0.0
      %558 = vmatpush1.msra.mxu0 %v530
      %559 = vmatprep.subr.mxu0 0.0
      %560 = vmatpush1.msra.mxu0 %v531
      %561 = vmatprep.subr.mxu0 0.0
      %562 = vmatpush1.msra.mxu0 0.0
      %563 = vmatprep.subr.mxu0 0.0
      %564 = vmatpush1.msra.mxu0 0.0
      %565 = vmatprep.subr.mxu0 0.0
      %566 = vmatpush1.msra.mxu0 0.0
      %567 = vmatprep.subr.mxu0 0.0
      %568 = vmatpush1.msra.mxu0 0.0
      %569 = vmatprep.subr.mxu0 0.0
      %570 = vmatpush1.msra.mxu0 0.0
      %571 = vmatprep.subr.mxu0 0.0
      %572 = vmatpush1.msra.mxu0 0.0
      %573 = vmatprep.subr.mxu0 0.0
      %574 = vmatpush1.msra.mxu0 0.0
      %575 = vmatprep.subr.mxu0 0.0
      %576 = vmatpush1.msra.mxu0 0.0
      %577 = vmatprep.subr.mxu0 0.0
      %578 = vmatpush1.msra.mxu0 0.0
      %579 = vmatprep.subr.mxu0 0.0
      %580 = vmatpush1.msra.mxu0 0.0
      %581 = vmatprep.subr.mxu0 0.0
      %582 = vmatpush1.msra.mxu0 0.0
      %583 = vmatprep.subr.mxu0 0.0
      %584 = vmatpush1.msra.mxu0 0.0
      %585 = vmatprep.subr.mxu0 0.0
      %586 = vmatpush1.msra.mxu0 0.0
      %587 = vmatprep.subr.mxu0 0.0
      %588 = vmatpush1.msra.mxu0 0.0
      %589 = vmatprep.subr.mxu0 0.0
      %590 = vmatpush1.msra.mxu0 0.0
      %591 = vmatprep.subr.mxu0 0.0
      %592 = vmatpush1.msra.mxu0 0.0
      %593 = vmatprep.subr.mxu0 0.0
      %594 = vmatpush1.msra.mxu0 0.0
      %595 = vmatprep.subr.mxu0 0.0
      %596 = vmatpush1.msra.mxu0 0.0
      %597 = vmatprep.subr.mxu0 0.0
      %598 = vmatpush1.msra.mxu0 0.0
      %599 = vmatprep.subr.mxu0 0.0
      %600 = vmatpush1.msra.mxu0 0.0
      %601 = vmatprep.subr.mxu0 0.0
      %602 = vmatpush1.msra.mxu0 0.0
      %603 = vmatprep.subr.mxu0 0.0
      %604 = vmatpush1.msra.mxu0 0.0
      %605 = vmatprep.subr.mxu0 0.0
      %606 = vmatpush1.msra.mxu0 0.0
      %607 = vmatprep.subr.mxu0 0.0
      %608 = vmatpush1.msra.mxu0 0.0
      %609 = vmatprep.mubr.f32.mxu0 0.0
      %610 = vmatmul.mubr.f32.gmra.mrb[0].mxu0 %v543
      %v611 = vpop.f32.mrb[0].mxu0
      %v612 = vadd.f32 %v537, %v611
      %v613 = vpop.f32.mrb[0].mxu0
      %614 = vdwg.mxu0
      %v615 = vld [vmem:[%s5] sm:$0xff]
      %v616 = vld [vmem:[%s5 + $0x8] sm:$0xff]
      %v617 = vld [vmem:[%s5 + $0x10] sm:$0xff]
      %v618 = vld [vmem:[%s5 + $0x18] sm:$0xff]
      %v619 = vld [vmem:[%s5 + $0x20] sm:$0xff]
      %v620 = vld [vmem:[%s5 + $0x28] sm:$0xff]
      %v621 = vld [vmem:[%s5 + $0x30] sm:$0xff]
      %v622 = vld [vmem:[%s5 + $0x38] sm:$0xff]
      %v623 = vld [vmem:[#allocation2] sm:$0x1]
      %v625 = vlaneseq
      %v626 = vshrl.u32 %v625, 7
      %v627 = vsub.s32 0, %v626
      %v628 = vrot.slane %v623, %v627
      %630 = vmatprep.subr.mxu0 0.0
      %631 = vmatpush1.msra.mxu0 %v615
      %632 = vmatprep.subr.mxu0 0.0
      %633 = vmatpush1.msra.mxu0 %v616
      %634 = vmatprep.subr.mxu0 0.0
      %635 = vmatpush1.msra.mxu0 %v617
      %636 = vmatprep.subr.mxu0 0.0
      %637 = vmatpush1.msra.mxu0 %v618
      %638 = vmatprep.subr.mxu0 0.0
      %639 = vmatpush1.msra.mxu0 %v619
      %640 = vmatprep.subr.mxu0 0.0
      %641 = vmatpush1.msra.mxu0 %v620
      %642 = vmatprep.subr.mxu0 0.0
      %643 = vmatpush1.msra.mxu0 %v621
      %644 = vmatprep.subr.mxu0 0.0
      %645 = vmatpush1.msra.mxu0 %v622
      %646 = vmatprep.subr.mxu0 0.0
      %647 = vmatpush1.msra.mxu0 0.0
      %648 = vmatprep.subr.mxu0 0.0
      %649 = vmatpush1.msra.mxu0 0.0
      %650 = vmatprep.subr.mxu0 0.0
      %651 = vmatpush1.msra.mxu0 0.0
      %652 = vmatprep.subr.mxu0 0.0
      %653 = vmatpush1.msra.mxu0 0.0
      %654 = vmatprep.subr.mxu0 0.0
      %655 = vmatpush1.msra.mxu0 0.0
      %656 = vmatprep.subr.mxu0 0.0
      %657 = vmatpush1.msra.mxu0 0.0
      %658 = vmatprep.subr.mxu0 0.0
      %659 = vmatpush1.msra.mxu0 0.0
      %660 = vmatprep.subr.mxu0 0.0
      %661 = vmatpush1.msra.mxu0 0.0
      %662 = vmatprep.subr.mxu0 0.0
      %663 = vmatpush1.msra.mxu0 0.0
      %664 = vmatprep.subr.mxu0 0.0
      %665 = vmatpush1.msra.mxu0 0.0
      %666 = vmatprep.subr.mxu0 0.0
      %667 = vmatpush1.msra.mxu0 0.0
      %668 = vmatprep.subr.mxu0 0.0
      %669 = vmatpush1.msra.mxu0 0.0
      %670 = vmatprep.subr.mxu0 0.0
      %671 = vmatpush1.msra.mxu0 0.0
      %672 = vmatprep.subr.mxu0 0.0
      %673 = vmatpush1.msra.mxu0 0.0
      %674 = vmatprep.subr.mxu0 0.0
      %675 = vmatpush1.msra.mxu0 0.0
      %676 = vmatprep.subr.mxu0 0.0
      %677 = vmatpush1.msra.mxu0 0.0
      %678 = vmatprep.subr.mxu0 0.0
      %679 = vmatpush1.msra.mxu0 0.0
      %680 = vmatprep.subr.mxu0 0.0
      %681 = vmatpush1.msra.mxu0 0.0
      %682 = vmatprep.subr.mxu0 0.0
      %683 = vmatpush1.msra.mxu0 0.0
      %684 = vmatprep.subr.mxu0 0.0
      %685 = vmatpush1.msra.mxu0 0.0
      %686 = vmatprep.subr.mxu0 0.0
      %687 = vmatpush1.msra.mxu0 0.0
      %688 = vmatprep.subr.mxu0 0.0
      %689 = vmatpush1.msra.mxu0 0.0
      %690 = vmatprep.subr.mxu0 0.0
      %691 = vmatpush1.msra.mxu0 0.0
      %692 = vmatprep.subr.mxu0 0.0
      %693 = vmatpush1.msra.mxu0 0.0
      %694 = vmatprep.mubr.f32.mxu0 0.0
      %695 = vmatmul.mubr.f32.gmra.mrb[0].mxu0 %v543
      %v696 = vpop.f32.mrb[0].mxu0
      %v697 = vadd.f32 %v628, %v696
      %v698 = vpop.f32.mrb[0].mxu0
      %699 = vdwg.mxu0
      %701 = vset.pattern.permute.xlu0 0
      %702 = vperm.xlu0 %701, %v697
      %v703 = vpop.permute.xlu0 %702
      %v706 = vsel %vm542, %v612, 0
      %v708 = vsel %vm542, %v522, 0
      %710 = vmatprep.subr.mxu0 0.0
      %711 = vmatpush1.xpose.msra.mxu0 %v708
      %712 = vmatprep.subr.mxu0 0.0
      %713 = vmatpush1.xpose.msra.mxu0 0.0
      %714 = vmatprep.subr.mxu0 0.0
      %715 = vmatpush1.xpose.msra.mxu0 0.0
      %716 = vmatprep.subr.mxu0 0.0
      %717 = vmatpush1.xpose.msra.mxu0 0.0
      %718 = vmatprep.subr.mxu0 0.0
      %719 = vmatpush1.xpose.msra.mxu0 0.0
      %720 = vmatprep.subr.mxu0 0.0
      %721 = vmatpush1.xpose.msra.mxu0 0.0
      %722 = vmatprep.subr.mxu0 0.0
      %723 = vmatpush1.xpose.msra.mxu0 0.0
      %724 = vmatprep.subr.mxu0 0.0
      %725 = vmatpush1.xpose.msra.mxu0 0.0
      %726 = vmatprep.subr.mxu0 0.0
      %727 = vmatpush1.xpose.msra.mxu0 0.0
      %728 = vmatprep.subr.mxu0 0.0
      %729 = vmatpush1.xpose.msra.mxu0 0.0
      %730 = vmatprep.subr.mxu0 0.0
      %731 = vmatpush1.xpose.msra.mxu0 0.0
      %732 = vmatprep.subr.mxu0 0.0
      %733 = vmatpush1.xpose.msra.mxu0 0.0
      %734 = vmatprep.subr.mxu0 0.0
      %735 = vmatpush1.xpose.msra.mxu0 0.0
      %736 = vmatprep.subr.mxu0 0.0
      %737 = vmatpush1.xpose.msra.mxu0 0.0
      %738 = vmatprep.subr.mxu0 0.0
      %739 = vmatpush1.xpose.msra.mxu0 0.0
      %740 = vmatprep.subr.mxu0 0.0
      %741 = vmatpush1.xpose.msra.mxu0 0.0
      %742 = vmatprep.subr.mxu0 0.0
      %743 = vmatpush1.xpose.msra.mxu0 0.0
      %744 = vmatprep.subr.mxu0 0.0
      %745 = vmatpush1.xpose.msra.mxu0 0.0
      %746 = vmatprep.subr.mxu0 0.0
      %747 = vmatpush1.xpose.msra.mxu0 0.0
      %748 = vmatprep.subr.mxu0 0.0
      %749 = vmatpush1.xpose.msra.mxu0 0.0
      %750 = vmatprep.subr.mxu0 0.0
      %751 = vmatpush1.xpose.msra.mxu0 0.0
      %752 = vmatprep.subr.mxu0 0.0
      %753 = vmatpush1.xpose.msra.mxu0 0.0
      %754 = vmatprep.subr.mxu0 0.0
      %755 = vmatpush1.xpose.msra.mxu0 0.0
      %756 = vmatprep.subr.mxu0 0.0
      %757 = vmatpush1.xpose.msra.mxu0 0.0
      %758 = vmatprep.subr.mxu0 0.0
      %759 = vmatpush1.xpose.msra.mxu0 0.0
      %760 = vmatprep.subr.mxu0 0.0
      %761 = vmatpush1.xpose.msra.mxu0 0.0
      %762 = vmatprep.subr.mxu0 0.0
      %763 = vmatpush1.xpose.msra.mxu0 0.0
      %764 = vmatprep.subr.mxu0 0.0
      %765 = vmatpush1.xpose.msra.mxu0 0.0
      %766 = vmatprep.subr.mxu0 0.0
      %767 = vmatpush1.xpose.msra.mxu0 0.0
      %768 = vmatprep.subr.mxu0 0.0
      %769 = vmatpush1.xpose.msra.mxu0 0.0
      %770 = vmatprep.subr.mxu0 0.0
      %771 = vmatpush1.xpose.msra.mxu0 0.0
      %772 = vmatprep.subr.mxu0 0.0
      %773 = vmatpush1.xpose.msra.mxu0 0.0
      %774 = vmatprep.mubr.f32.mxu0 0.0
      %775 = vmatmul.mubr.f32.gmra.mrb[0].mxu0 %v706
      %v776 = vpop.f32.mrb[0].mxu0
      %v777 = vadd.f32 %v703, %v776
      %v778 = vpop.f32.mrb[0].mxu0
      %779 = vdwg.mxu0
      %vm780 = vcmask 64512
      %781 = vst.msk [vmem:[%s417] sm:$0xff] %vm780, %v777
      %v782 = vld [vmem:[%s7] sm:$0xff]
      %v783 = vld [vmem:[%s7 + $0x8] sm:$0xff]
      %v784 = vld [vmem:[%s7 + $0x10] sm:$0xff]
      %v785 = vld [vmem:[%s7 + $0x18] sm:$0xff]
      %v786 = vld [vmem:[%s7 + $0x20] sm:$0xff]
      %v787 = vld [vmem:[%s7 + $0x28] sm:$0xff]
      %v788 = vld [vmem:[%s7 + $0x30] sm:$0xff]
      %v789 = vld [vmem:[%s7 + $0x38] sm:$0xff]
      %v790 = vld [vmem:[%s8] sm:$0x3]
      %v792 = vlaneseq
      %v793 = vshrl.u32 %v792, 7
      %v794 = vsub.s32 0, %v793
      %v795 = vrot.slane %v790, %v794
      %v796 = vlaneseq
      %v797 = vshrl.u32 %v796, 7
      %v798 = vsub.s32 1, %v797
      %v799 = vrot.slane %v790, %v798
      %803 = vrot.lane.b32.xlu0 %v523, 96
      %v804 = vpop.permute.xlu0 %803
      %v805 = vsel %vm443, %v804, 0
      %807 = vmatprep.subr.mxu0 %v783
      %808 = vmatpush1.msra.mxu0 %v782
      %809 = vmatprep.subr.mxu0 %v785
      %810 = vmatpush1.msra.mxu0 %v784
      %811 = vmatprep.subr.mxu0 %v787
      %812 = vmatpush1.msra.mxu0 %v786
      %813 = vmatprep.subr.mxu0 %v789
      %814 = vmatpush1.msra.mxu0 %v788
      %815 = vmatprep.subr.mxu0 0.0
      %816 = vmatpush1.msra.mxu0 0.0
      %817 = vmatprep.subr.mxu0 0.0
      %818 = vmatpush1.msra.mxu0 0.0
      %819 = vmatprep.subr.mxu0 0.0
      %820 = vmatpush1.msra.mxu0 0.0
      %821 = vmatprep.subr.mxu0 0.0
      %822 = vmatpush1.msra.mxu0 0.0
      %823 = vmatprep.subr.mxu0 0.0
      %824 = vmatpush1.msra.mxu0 0.0
      %825 = vmatprep.subr.mxu0 0.0
      %826 = vmatpush1.msra.mxu0 0.0
      %827 = vmatprep.subr.mxu0 0.0
      %828 = vmatpush1.msra.mxu0 0.0
      %829 = vmatprep.subr.mxu0 0.0
      %830 = vmatpush1.msra.mxu0 0.0
      %831 = vmatprep.subr.mxu0 0.0
      %832 = vmatpush1.msra.mxu0 0.0
      %833 = vmatprep.subr.mxu0 0.0
      %834 = vmatpush1.msra.mxu0 0.0
      %835 = vmatprep.subr.mxu0 0.0
      %836 = vmatpush1.msra.mxu0 0.0
      %837 = vmatprep.subr.mxu0 0.0
      %838 = vmatpush1.msra.mxu0 0.0
      %839 = vmatprep.subr.mxu0 0.0
      %840 = vmatpush1.msra.mxu0 0.0
      %841 = vmatprep.subr.mxu0 0.0
      %842 = vmatpush1.msra.mxu0 0.0
      %843 = vmatprep.subr.mxu0 0.0
      %844 = vmatpush1.msra.mxu0 0.0
      %845 = vmatprep.subr.mxu0 0.0
      %846 = vmatpush1.msra.mxu0 0.0
      %847 = vmatprep.subr.mxu0 0.0
      %848 = vmatpush1.msra.mxu0 0.0
      %849 = vmatprep.subr.mxu0 0.0
      %850 = vmatpush1.msra.mxu0 0.0
      %851 = vmatprep.subr.mxu0 0.0
      %852 = vmatpush1.msra.mxu0 0.0
      %853 = vmatprep.subr.mxu0 0.0
      %854 = vmatpush1.msra.mxu0 0.0
      %855 = vmatprep.subr.mxu0 0.0
      %856 = vmatpush1.msra.mxu0 0.0
      %857 = vmatprep.subr.mxu0 0.0
      %858 = vmatpush1.msra.mxu0 0.0
      %859 = vmatprep.subr.mxu0 0.0
      %860 = vmatpush1.msra.mxu0 0.0
      %861 = vmatprep.subr.mxu0 0.0
      %862 = vmatpush1.msra.mxu0 0.0
      %863 = vmatprep.subr.mxu0 0.0
      %864 = vmatpush1.msra.mxu0 0.0
      %865 = vmatprep.subr.mxu0 0.0
      %866 = vmatpush1.msra.mxu0 0.0
      %867 = vmatprep.subr.mxu0 0.0
      %868 = vmatpush1.msra.mxu0 0.0
      %869 = vmatprep.subr.mxu0 0.0
      %870 = vmatpush1.msra.mxu0 0.0
      %871 = vmatprep.mubr.f32.mxu0 0.0
      %872 = vmatmul.mubr.f32.gmra.mrb[0].mxu0 %v805
      %v873 = vpop.f32.mrb[0].mxu0
      %v874 = vadd.f32 %v795, %v873
      %v875 = vpop.f32.mrb[0].mxu0
      %v876 = vadd.f32 %v799, %v875
      %877 = vdwg.mxu0
      %v878 = vld [vmem:[%s9] sm:$0xff]
      %v879 = vld [vmem:[%s9 + $0x8] sm:$0xff]
      %v880 = vld [vmem:[%s9 + $0x10] sm:$0xff]
      %v881 = vld [vmem:[%s9 + $0x18] sm:$0xff]
      %v882 = vld [vmem:[%s10] sm:$0x1]
      %v884 = vlaneseq
      %v885 = vshrl.u32 %v884, 7
      %v886 = vsub.s32 0, %v885
      %v887 = vrot.slane %v882, %v886
      %889 = vmatprep.subr.mxu0 0.0
      %890 = vmatpush1.msra.mxu0 %v878
      %891 = vmatprep.subr.mxu0 0.0
      %892 = vmatpush1.msra.mxu0 %v879
      %893 = vmatprep.subr.mxu0 0.0
      %894 = vmatpush1.msra.mxu0 %v880
      %895 = vmatprep.subr.mxu0 0.0
      %896 = vmatpush1.msra.mxu0 %v881
      %897 = vmatprep.subr.mxu0 0.0
      %898 = vmatpush1.msra.mxu0 0.0
      %899 = vmatprep.subr.mxu0 0.0
      %900 = vmatpush1.msra.mxu0 0.0
      %901 = vmatprep.subr.mxu0 0.0
      %902 = vmatpush1.msra.mxu0 0.0
      %903 = vmatprep.subr.mxu0 0.0
      %904 = vmatpush1.msra.mxu0 0.0
      %905 = vmatprep.subr.mxu0 0.0
      %906 = vmatpush1.msra.mxu0 0.0
      %907 = vmatprep.subr.mxu0 0.0
      %908 = vmatpush1.msra.mxu0 0.0
      %909 = vmatprep.subr.mxu0 0.0
      %910 = vmatpush1.msra.mxu0 0.0
      %911 = vmatprep.subr.mxu0 0.0
      %912 = vmatpush1.msra.mxu0 0.0
      %913 = vmatprep.subr.mxu0 0.0
      %914 = vmatpush1.msra.mxu0 0.0
      %915 = vmatprep.subr.mxu0 0.0
      %916 = vmatpush1.msra.mxu0 0.0
      %917 = vmatprep.subr.mxu0 0.0
      %918 = vmatpush1.msra.mxu0 0.0
      %919 = vmatprep.subr.mxu0 0.0
      %920 = vmatpush1.msra.mxu0 0.0
      %921 = vmatprep.subr.mxu0 0.0
      %922 = vmatpush1.msra.mxu0 0.0
      %923 = vmatprep.subr.mxu0 0.0
      %924 = vmatpush1.msra.mxu0 0.0
      %925 = vmatprep.subr.mxu0 0.0
      %926 = vmatpush1.msra.mxu0 0.0
      %927 = vmatprep.subr.mxu0 0.0
      %928 = vmatpush1.msra.mxu0 0.0
      %929 = vmatprep.subr.mxu0 0.0
      %930 = vmatpush1.msra.mxu0 0.0
      %931 = vmatprep.subr.mxu0 0.0
      %932 = vmatpush1.msra.mxu0 0.0
      %933 = vmatprep.subr.mxu0 0.0
      %934 = vmatpush1.msra.mxu0 0.0
      %935 = vmatprep.subr.mxu0 0.0
      %936 = vmatpush1.msra.mxu0 0.0
      %937 = vmatprep.subr.mxu0 0.0
      %938 = vmatpush1.msra.mxu0 0.0
      %939 = vmatprep.subr.mxu0 0.0
      %940 = vmatpush1.msra.mxu0 0.0
      %941 = vmatprep.subr.mxu0 0.0
      %942 = vmatpush1.msra.mxu0 0.0
      %943 = vmatprep.subr.mxu0 0.0
      %944 = vmatpush1.msra.mxu0 0.0
      %945 = vmatprep.subr.mxu0 0.0
      %946 = vmatpush1.msra.mxu0 0.0
      %947 = vmatprep.subr.mxu0 0.0
      %948 = vmatpush1.msra.mxu0 0.0
      %949 = vmatprep.subr.mxu0 0.0
      %950 = vmatpush1.msra.mxu0 0.0
      %951 = vmatprep.subr.mxu0 0.0
      %952 = vmatpush1.msra.mxu0 0.0
      %953 = vmatprep.mubr.f32.mxu0 0.0
      %954 = vmatmul.mubr.f32.gmra.mrb[0].mxu0 %v805
      %v955 = vpop.f32.mrb[0].mxu0
      %v956 = vadd.f32 %v887, %v955
      %v957 = vpop.f32.mrb[0].mxu0
      %958 = vdwg.mxu0
      %960 = vset.pattern.permute.xlu0 0
      %961 = vperm.xlu0 %960, %v956
      %v962 = vpop.permute.xlu0 %961
      %v965 = vsel %vm443, %v874, 0
      %v967 = vsel %vm443, %v523, 0
      %969 = vmatprep.subr.mxu0 0.0
      %970 = vmatpush1.xpose.msra.mxu0 %v967
      %971 = vmatprep.subr.mxu0 0.0
      %972 = vmatpush1.xpose.msra.mxu0 0.0
      %973 = vmatprep.subr.mxu0 0.0
      %974 = vmatpush1.xpose.msra.mxu0 0.0
      %975 = vmatprep.subr.mxu0 0.0
      %976 = vmatpush1.xpose.msra.mxu0 0.0
      %977 = vmatprep.subr.mxu0 0.0
      %978 = vmatpush1.xpose.msra.mxu0 0.0
      %979 = vmatprep.subr.mxu0 0.0
      %980 = vmatpush1.xpose.msra.mxu0 0.0
      %981 = vmatprep.subr.mxu0 0.0
      %982 = vmatpush1.xpose.msra.mxu0 0.0
      %983 = vmatprep.subr.mxu0 0.0
      %984 = vmatpush1.xpose.msra.mxu0 0.0
      %985 = vmatprep.subr.mxu0 0.0
      %986 = vmatpush1.xpose.msra.mxu0 0.0
      %987 = vmatprep.subr.mxu0 0.0
      %988 = vmatpush1.xpose.msra.mxu0 0.0
      %989 = vmatprep.subr.mxu0 0.0
      %990 = vmatpush1.xpose.msra.mxu0 0.0
      %991 = vmatprep.subr.mxu0 0.0
      %992 = vmatpush1.xpose.msra.mxu0 0.0
      %993 = vmatprep.subr.mxu0 0.0
      %994 = vmatpush1.xpose.msra.mxu0 0.0
      %995 = vmatprep.subr.mxu0 0.0
      %996 = vmatpush1.xpose.msra.mxu0 0.0
      %997 = vmatprep.subr.mxu0 0.0
      %998 = vmatpush1.xpose.msra.mxu0 0.0
      %999 = vmatprep.subr.mxu0 0.0
      %1000 = vmatpush1.xpose.msra.mxu0 0.0
      %1001 = vmatprep.subr.mxu0 0.0
      %1002 = vmatpush1.xpose.msra.mxu0 0.0
      %1003 = vmatprep.subr.mxu0 0.0
      %1004 = vmatpush1.xpose.msra.mxu0 0.0
      %1005 = vmatprep.subr.mxu0 0.0
      %1006 = vmatpush1.xpose.msra.mxu0 0.0
      %1007 = vmatprep.subr.mxu0 0.0
      %1008 = vmatpush1.xpose.msra.mxu0 0.0
      %1009 = vmatprep.subr.mxu0 0.0
      %1010 = vmatpush1.xpose.msra.mxu0 0.0
      %1011 = vmatprep.subr.mxu0 0.0
      %1012 = vmatpush1.xpose.msra.mxu0 0.0
      %1013 = vmatprep.subr.mxu0 0.0
      %1014 = vmatpush1.xpose.msra.mxu0 0.0
      %1015 = vmatprep.subr.mxu0 0.0
      %1016 = vmatpush1.xpose.msra.mxu0 0.0
      %1017 = vmatprep.subr.mxu0 0.0
      %1018 = vmatpush1.xpose.msra.mxu0 0.0
      %1019 = vmatprep.subr.mxu0 0.0
      %1020 = vmatpush1.xpose.msra.mxu0 0.0
      %1021 = vmatprep.subr.mxu0 0.0
      %1022 = vmatpush1.xpose.msra.mxu0 0.0
      %1023 = vmatprep.subr.mxu0 0.0
      %1024 = vmatpush1.xpose.msra.mxu0 0.0
      %1025 = vmatprep.subr.mxu0 0.0
      %1026 = vmatpush1.xpose.msra.mxu0 0.0
      %1027 = vmatprep.subr.mxu0 0.0
      %1028 = vmatpush1.xpose.msra.mxu0 0.0
      %1029 = vmatprep.subr.mxu0 0.0
      %1030 = vmatpush1.xpose.msra.mxu0 0.0
      %1031 = vmatprep.subr.mxu0 0.0
      %1032 = vmatpush1.xpose.msra.mxu0 0.0
      %1033 = vmatprep.mubr.f32.mxu0 0.0
      %1034 = vmatmul.mubr.f32.gmra.mrb[0].mxu0 %v965
      %v1035 = vpop.f32.mrb[0].mxu0
      %v1036 = vadd.f32 %v962, %v1035
      %v1037 = vpop.f32.mrb[0].mxu0
      %1038 = vdwg.mxu0
      %1039 = vst.msk [vmem:[%s421] sm:$0xff] %vm780, %v1036
      %1040 = vset.pattern.permute.xlu0 1
      %1041 = vperm.xlu0 %1040, %v956
      %v1042 = vpop.permute.xlu0 %1041
      %1044 = vrot.lane.b32.xlu0 %v874, 96
      %v1045 = vpop.permute.xlu0 %1044
      %v1046 = vsel %vm443, %v1045, 0
      %1048 = vmatprep.subr.mxu0 0.0
      %1049 = vmatpush1.xpose.msra.mxu0 %v967
      %1050 = vmatprep.subr.mxu0 0.0
      %1051 = vmatpush1.xpose.msra.mxu0 0.0
      %1052 = vmatprep.subr.mxu0 0.0
      %1053 = vmatpush1.xpose.msra.mxu0 0.0
      %1054 = vmatprep.subr.mxu0 0.0
      %1055 = vmatpush1.xpose.msra.mxu0 0.0
      %1056 = vmatprep.subr.mxu0 0.0
      %1057 = vmatpush1.xpose.msra.mxu0 0.0
      %1058 = vmatprep.subr.mxu0 0.0
      %1059 = vmatpush1.xpose.msra.mxu0 0.0
      %1060 = vmatprep.subr.mxu0 0.0
      %1061 = vmatpush1.xpose.msra.mxu0 0.0
      %1062 = vmatprep.subr.mxu0 0.0
      %1063 = vmatpush1.xpose.msra.mxu0 0.0
      %1064 = vmatprep.subr.mxu0 0.0
      %1065 = vmatpush1.xpose.msra.mxu0 0.0
      %1066 = vmatprep.subr.mxu0 0.0
      %1067 = vmatpush1.xpose.msra.mxu0 0.0
      %1068 = vmatprep.subr.mxu0 0.0
      %1069 = vmatpush1.xpose.msra.mxu0 0.0
      %1070 = vmatprep.subr.mxu0 0.0
      %1071 = vmatpush1.xpose.msra.mxu0 0.0
      %1072 = vmatprep.subr.mxu0 0.0
      %1073 = vmatpush1.xpose.msra.mxu0 0.0
      %1074 = vmatprep.subr.mxu0 0.0
      %1075 = vmatpush1.xpose.msra.mxu0 0.0
      %1076 = vmatprep.subr.mxu0 0.0
      %1077 = vmatpush1.xpose.msra.mxu0 0.0
      %1078 = vmatprep.subr.mxu0 0.0
      %1079 = vmatpush1.xpose.msra.mxu0 0.0
      %1080 = vmatprep.subr.mxu0 0.0
      %1081 = vmatpush1.xpose.msra.mxu0 0.0
      %1082 = vmatprep.subr.mxu0 0.0
      %1083 = vmatpush1.xpose.msra.mxu0 0.0
      %1084 = vmatprep.subr.mxu0 0.0
      %1085 = vmatpush1.xpose.msra.mxu0 0.0
      %1086 = vmatprep.subr.mxu0 0.0
      %1087 = vmatpush1.xpose.msra.mxu0 0.0
      %1088 = vmatprep.subr.mxu0 0.0
      %1089 = vmatpush1.xpose.msra.mxu0 0.0
      %1090 = vmatprep.subr.mxu0 0.0
      %1091 = vmatpush1.xpose.msra.mxu0 0.0
      %1092 = vmatprep.subr.mxu0 0.0
      %1093 = vmatpush1.xpose.msra.mxu0 0.0
      %1094 = vmatprep.subr.mxu0 0.0
      %1095 = vmatpush1.xpose.msra.mxu0 0.0
      %1096 = vmatprep.subr.mxu0 0.0
      %1097 = vmatpush1.xpose.msra.mxu0 0.0
      %1098 = vmatprep.subr.mxu0 0.0
      %1099 = vmatpush1.xpose.msra.mxu0 0.0
      %1100 = vmatprep.subr.mxu0 0.0
      %1101 = vmatpush1.xpose.msra.mxu0 0.0
      %1102 = vmatprep.subr.mxu0 0.0
      %1103 = vmatpush1.xpose.msra.mxu0 0.0
      %1104 = vmatprep.subr.mxu0 0.0
      %1105 = vmatpush1.xpose.msra.mxu0 0.0
      %1106 = vmatprep.subr.mxu0 0.0
      %1107 = vmatpush1.xpose.msra.mxu0 0.0
      %1108 = vmatprep.subr.mxu0 0.0
      %1109 = vmatpush1.xpose.msra.mxu0 0.0
      %1110 = vmatprep.subr.mxu0 0.0
      %1111 = vmatpush1.xpose.msra.mxu0 0.0
      %1112 = vmatprep.mubr.f32.mxu0 0.0
      %1113 = vmatmul.mubr.f32.gmra.mrb[0].mxu0 %v1046
      %v1114 = vpop.f32.mrb[0].mxu0
      %v1115 = vadd.f32 %v1042, %v1114
      %v1116 = vpop.f32.mrb[0].mxu0
      %1117 = vdwg.mxu0
      %1119 = vrot.lane.b32.xlu0 %v1115, 8
      %v1120 = vpop.permute.xlu0 %1119
      %vm1122 = vcmask 130112
      %1123 = vst.msk [vmem:[%s421] sm:$0xff] %vm1122, %v1120
      %1124 = vset.pattern.permute.xlu0 2
      %1125 = vperm.xlu0 %1124, %v956
      %v1126 = vpop.permute.xlu0 %1125
      %1128 = vrot.lane.b32.xlu0 %v874, 64
      %v1129 = vpop.permute.xlu0 %1128
      %v1130 = vsel %vm443, %v1129, 0
      %1132 = vmatprep.subr.mxu0 0.0
      %1133 = vmatpush1.xpose.msra.mxu0 %v967
      %1134 = vmatprep.subr.mxu0 0.0
      %1135 = vmatpush1.xpose.msra.mxu0 0.0
      %1136 = vmatprep.subr.mxu0 0.0
      %1137 = vmatpush1.xpose.msra.mxu0 0.0
      %1138 = vmatprep.subr.mxu0 0.0
      %1139 = vmatpush1.xpose.msra.mxu0 0.0
      %1140 = vmatprep.subr.mxu0 0.0
      %1141 = vmatpush1.xpose.msra.mxu0 0.0
      %1142 = vmatprep.subr.mxu0 0.0
      %1143 = vmatpush1.xpose.msra.mxu0 0.0
      %1144 = vmatprep.subr.mxu0 0.0
      %1145 = vmatpush1.xpose.msra.mxu0 0.0
      %1146 = vmatprep.subr.mxu0 0.0
      %1147 = vmatpush1.xpose.msra.mxu0 0.0
      %1148 = vmatprep.subr.mxu0 0.0
      %1149 = vmatpush1.xpose.msra.mxu0 0.0
      %1150 = vmatprep.subr.mxu0 0.0
      %1151 = vmatpush1.xpose.msra.mxu0 0.0
      %1152 = vmatprep.subr.mxu0 0.0
      %1153 = vmatpush1.xpose.msra.mxu0 0.0
      %1154 = vmatprep.subr.mxu0 0.0
      %1155 = vmatpush1.xpose.msra.mxu0 0.0
      %1156 = vmatprep.subr.mxu0 0.0
      %1157 = vmatpush1.xpose.msra.mxu0 0.0
      %1158 = vmatprep.subr.mxu0 0.0
      %1159 = vmatpush1.xpose.msra.mxu0 0.0
      %1160 = vmatprep.subr.mxu0 0.0
      %1161 = vmatpush1.xpose.msra.mxu0 0.0
      %1162 = vmatprep.subr.mxu0 0.0
      %1163 = vmatpush1.xpose.msra.mxu0 0.0
      %1164 = vmatprep.subr.mxu0 0.0
      %1165 = vmatpush1.xpose.msra.mxu0 0.0
      %1166 = vmatprep.subr.mxu0 0.0
      %1167 = vmatpush1.xpose.msra.mxu0 0.0
      %1168 = vmatprep.subr.mxu0 0.0
      %1169 = vmatpush1.xpose.msra.mxu0 0.0
      %1170 = vmatprep.subr.mxu0 0.0
      %1171 = vmatpush1.xpose.msra.mxu0 0.0
      %1172 = vmatprep.subr.mxu0 0.0
      %1173 = vmatpush1.xpose.msra.mxu0 0.0
      %1174 = vmatprep.subr.mxu0 0.0
      %1175 = vmatpush1.xpose.msra.mxu0 0.0
      %1176 = vmatprep.subr.mxu0 0.0
      %1177 = vmatpush1.xpose.msra.mxu0 0.0
      %1178 = vmatprep.subr.mxu0 0.0
      %1179 = vmatpush1.xpose.msra.mxu0 0.0
      %1180 = vmatprep.subr.mxu0 0.0
      %1181 = vmatpush1.xpose.msra.mxu0 0.0
      %1182 = vmatprep.subr.mxu0 0.0
      %1183 = vmatpush1.xpose.msra.mxu0 0.0
      %1184 = vmatprep.subr.mxu0 0.0
      %1185 = vmatpush1.xpose.msra.mxu0 0.0
      %1186 = vmatprep.subr.mxu0 0.0
      %1187 = vmatpush1.xpose.msra.mxu0 0.0
      %1188 = vmatprep.subr.mxu0 0.0
      %1189 = vmatpush1.xpose.msra.mxu0 0.0
      %1190 = vmatprep.subr.mxu0 0.0
      %1191 = vmatpush1.xpose.msra.mxu0 0.0
      %1192 = vmatprep.subr.mxu0 0.0
      %1193 = vmatpush1.xpose.msra.mxu0 0.0
      %1194 = vmatprep.subr.mxu0 0.0
      %1195 = vmatpush1.xpose.msra.mxu0 0.0
      %1196 = vmatprep.mubr.f32.mxu0 0.0
      %1197 = vmatmul.mubr.f32.gmra.mrb[0].mxu0 %v1130
      %v1198 = vpop.f32.mrb[0].mxu0
      %v1199 = vadd.f32 %v1126, %v1198
      %v1200 = vpop.f32.mrb[0].mxu0
      %1201 = vdwg.mxu0
      %1203 = vrot.lane.b32.xlu0 %v1199, 16
      %v1204 = vpop.permute.xlu0 %1203
      %vm1206 = vcmask 195712
      %1207 = vst.msk [vmem:[%s421] sm:$0xff] %vm1206, %v1204
      %1208 = vset.pattern.permute.xlu0 3
      %1209 = vperm.xlu0 %1208, %v956
      %v1210 = vpop.permute.xlu0 %1209
      %1212 = vrot.lane.b32.xlu0 %v874, 32
      %v1213 = vpop.permute.xlu0 %1212
      %v1214 = vsel %vm443, %v1213, 0
      %1216 = vmatprep.subr.mxu0 0.0
      %1217 = vmatpush1.xpose.msra.mxu0 %v967
      %1218 = vmatprep.subr.mxu0 0.0
      %1219 = vmatpush1.xpose.msra.mxu0 0.0
      %1220 = vmatprep.subr.mxu0 0.0
      %1221 = vmatpush1.xpose.msra.mxu0 0.0
      %1222 = vmatprep.subr.mxu0 0.0
      %1223 = vmatpush1.xpose.msra.mxu0 0.0
      %1224 = vmatprep.subr.mxu0 0.0
      %1225 = vmatpush1.xpose.msra.mxu0 0.0
      %1226 = vmatprep.subr.mxu0 0.0
      %1227 = vmatpush1.xpose.msra.mxu0 0.0
      %1228 = vmatprep.subr.mxu0 0.0
      %1229 = vmatpush1.xpose.msra.mxu0 0.0
      %1230 = vmatprep.subr.mxu0 0.0
      %1231 = vmatpush1.xpose.msra.mxu0 0.0
      %1232 = vmatprep.subr.mxu0 0.0
      %1233 = vmatpush1.xpose.msra.mxu0 0.0
      %1234 = vmatprep.subr.mxu0 0.0
      %1235 = vmatpush1.xpose.msra.mxu0 0.0
      %1236 = vmatprep.subr.mxu0 0.0
      %1237 = vmatpush1.xpose.msra.mxu0 0.0
      %1238 = vmatprep.subr.mxu0 0.0
      %1239 = vmatpush1.xpose.msra.mxu0 0.0
      %1240 = vmatprep.subr.mxu0 0.0
      %1241 = vmatpush1.xpose.msra.mxu0 0.0
      %1242 = vmatprep.subr.mxu0 0.0
      %1243 = vmatpush1.xpose.msra.mxu0 0.0
      %1244 = vmatprep.subr.mxu0 0.0
      %1245 = vmatpush1.xpose.msra.mxu0 0.0
      %1246 = vmatprep.subr.mxu0 0.0
      %1247 = vmatpush1.xpose.msra.mxu0 0.0
      %1248 = vmatprep.subr.mxu0 0.0
      %1249 = vmatpush1.xpose.msra.mxu0 0.0
      %1250 = vmatprep.subr.mxu0 0.0
      %1251 = vmatpush1.xpose.msra.mxu0 0.0
      %1252 = vmatprep.subr.mxu0 0.0
      %1253 = vmatpush1.xpose.msra.mxu0 0.0
      %1254 = vmatprep.subr.mxu0 0.0
      %1255 = vmatpush1.xpose.msra.mxu0 0.0
      %1256 = vmatprep.subr.mxu0 0.0
      %1257 = vmatpush1.xpose.msra.mxu0 0.0
      %1258 = vmatprep.subr.mxu0 0.0
      %1259 = vmatpush1.xpose.msra.mxu0 0.0
      %1260 = vmatprep.subr.mxu0 0.0
      %1261 = vmatpush1.xpose.msra.mxu0 0.0
      %1262 = vmatprep.subr.mxu0 0.0
      %1263 = vmatpush1.xpose.msra.mxu0 0.0
      %1264 = vmatprep.subr.mxu0 0.0
      %1265 = vmatpush1.xpose.msra.mxu0 0.0
      %1266 = vmatprep.subr.mxu0 0.0
      %1267 = vmatpush1.xpose.msra.mxu0 0.0
      %1268 = vmatprep.subr.mxu0 0.0
      %1269 = vmatpush1.xpose.msra.mxu0 0.0
      %1270 = vmatprep.subr.mxu0 0.0
      %1271 = vmatpush1.xpose.msra.mxu0 0.0
      %1272 = vmatprep.subr.mxu0 0.0
      %1273 = vmatpush1.xpose.msra.mxu0 0.0
      %1274 = vmatprep.subr.mxu0 0.0
      %1275 = vmatpush1.xpose.msra.mxu0 0.0
      %1276 = vmatprep.subr.mxu0 0.0
      %1277 = vmatpush1.xpose.msra.mxu0 0.0
      %1278 = vmatprep.subr.mxu0 0.0
      %1279 = vmatpush1.xpose.msra.mxu0 0.0
      %1280 = vmatprep.mubr.f32.mxu0 0.0
      %1281 = vmatmul.mubr.f32.gmra.mrb[0].mxu0 %v1214
      %v1282 = vpop.f32.mrb[0].mxu0
      %v1283 = vadd.f32 %v1210, %v1282
      %v1284 = vpop.f32.mrb[0].mxu0
      %1285 = vdwg.mxu0
      %1287 = vrot.lane.b32.xlu0 %v1283, 24
      %v1288 = vpop.permute.xlu0 %1287
      %vm1290 = vcmask 261312
      %1291 = vst.msk [vmem:[%s421] sm:$0xff] %vm1290, %v1288
      %1292 = vset.pattern.permute.xlu0 4
      %1293 = vperm.xlu0 %1292, %v956
      %v1294 = vpop.permute.xlu0 %1293
      %v1297 = vsel %vm443, %v876, 0
      %1299 = vmatprep.subr.mxu0 0.0
      %1300 = vmatpush1.xpose.msra.mxu0 %v967
      %1301 = vmatprep.subr.mxu0 0.0
      %1302 = vmatpush1.xpose.msra.mxu0 0.0
      %1303 = vmatprep.subr.mxu0 0.0
      %1304 = vmatpush1.xpose.msra.mxu0 0.0
      %1305 = vmatprep.subr.mxu0 0.0
      %1306 = vmatpush1.xpose.msra.mxu0 0.0
      %1307 = vmatprep.subr.mxu0 0.0
      %1308 = vmatpush1.xpose.msra.mxu0 0.0
      %1309 = vmatprep.subr.mxu0 0.0
      %1310 = vmatpush1.xpose.msra.mxu0 0.0
      %1311 = vmatprep.subr.mxu0 0.0
      %1312 = vmatpush1.xpose.msra.mxu0 0.0
      %1313 = vmatprep.subr.mxu0 0.0
      %1314 = vmatpush1.xpose.msra.mxu0 0.0
      %1315 = vmatprep.subr.mxu0 0.0
      %1316 = vmatpush1.xpose.msra.mxu0 0.0
      %1317 = vmatprep.subr.mxu0 0.0
      %1318 = vmatpush1.xpose.msra.mxu0 0.0
      %1319 = vmatprep.subr.mxu0 0.0
      %1320 = vmatpush1.xpose.msra.mxu0 0.0
      %1321 = vmatprep.subr.mxu0 0.0
      %1322 = vmatpush1.xpose.msra.mxu0 0.0
      %1323 = vmatprep.subr.mxu0 0.0
      %1324 = vmatpush1.xpose.msra.mxu0 0.0
      %1325 = vmatprep.subr.mxu0 0.0
      %1326 = vmatpush1.xpose.msra.mxu0 0.0
      %1327 = vmatprep.subr.mxu0 0.0
      %1328 = vmatpush1.xpose.msra.mxu0 0.0
      %1329 = vmatprep.subr.mxu0 0.0
      %1330 = vmatpush1.xpose.msra.mxu0 0.0
      %1331 = vmatprep.subr.mxu0 0.0
      %1332 = vmatpush1.xpose.msra.mxu0 0.0
      %1333 = vmatprep.subr.mxu0 0.0
      %1334 = vmatpush1.xpose.msra.mxu0 0.0
      %1335 = vmatprep.subr.mxu0 0.0
      %1336 = vmatpush1.xpose.msra.mxu0 0.0
      %1337 = vmatprep.subr.mxu0 0.0
      %1338 = vmatpush1.xpose.msra.mxu0 0.0
      %1339 = vmatprep.subr.mxu0 0.0
      %1340 = vmatpush1.xpose.msra.mxu0 0.0
      %1341 = vmatprep.subr.mxu0 0.0
      %1342 = vmatpush1.xpose.msra.mxu0 0.0
      %1343 = vmatprep.subr.mxu0 0.0
      %1344 = vmatpush1.xpose.msra.mxu0 0.0
      %1345 = vmatprep.subr.mxu0 0.0
      %1346 = vmatpush1.xpose.msra.mxu0 0.0
      %1347 = vmatprep.subr.mxu0 0.0
      %1348 = vmatpush1.xpose.msra.mxu0 0.0
      %1349 = vmatprep.subr.mxu0 0.0
      %1350 = vmatpush1.xpose.msra.mxu0 0.0
      %1351 = vmatprep.subr.mxu0 0.0
      %1352 = vmatpush1.xpose.msra.mxu0 0.0
      %1353 = vmatprep.subr.mxu0 0.0
      %1354 = vmatpush1.xpose.msra.mxu0 0.0
      %1355 = vmatprep.subr.mxu0 0.0
      %1356 = vmatpush1.xpose.msra.mxu0 0.0
      %1357 = vmatprep.subr.mxu0 0.0
      %1358 = vmatpush1.xpose.msra.mxu0 0.0
      %1359 = vmatprep.subr.mxu0 0.0
      %1360 = vmatpush1.xpose.msra.mxu0 0.0
      %1361 = vmatprep.subr.mxu0 0.0
      %1362 = vmatpush1.xpose.msra.mxu0 0.0
      %1363 = vmatprep.mubr.f32.mxu0 0.0
      %1364 = vmatmul.mubr.f32.gmra.mrb[0].mxu0 %v1297
      %v1365 = vpop.f32.mrb[0].mxu0
      %v1366 = vadd.f32 %v1294, %v1365
      %v1367 = vpop.f32.mrb[0].mxu0
      %1368 = vdwg.mxu0
      %1370 = vrot.lane.b32.xlu0 %v1366, 32
      %v1371 = vpop.permute.xlu0 %1370
      %vm1373 = vcmask 326912
      %1374 = vst.msk [vmem:[%s421] sm:$0xff] %vm1373, %v1371
      %1375 = vset.pattern.permute.xlu0 5
      %1376 = vperm.xlu0 %1375, %v956
      %v1377 = vpop.permute.xlu0 %1376
      %1379 = vrot.lane.b32.xlu0 %v876, 96
      %v1380 = vpop.permute.xlu0 %1379
      %v1381 = vsel %vm443, %v1380, 0
      %1383 = vmatprep.subr.mxu0 0.0
      %1384 = vmatpush1.xpose.msra.mxu0 %v967
      %1385 = vmatprep.subr.mxu0 0.0
      %1386 = vmatpush1.xpose.msra.mxu0 0.0
      %1387 = vmatprep.subr.mxu0 0.0
      %1388 = vmatpush1.xpose.msra.mxu0 0.0
      %1389 = vmatprep.subr.mxu0 0.0
      %1390 = vmatpush1.xpose.msra.mxu0 0.0
      %1391 = vmatprep.subr.mxu0 0.0
      %1392 = vmatpush1.xpose.msra.mxu0 0.0
      %1393 = vmatprep.subr.mxu0 0.0
      %1394 = vmatpush1.xpose.msra.mxu0 0.0
      %1395 = vmatprep.subr.mxu0 0.0
      %1396 = vmatpush1.xpose.msra.mxu0 0.0
      %1397 = vmatprep.subr.mxu0 0.0
      %1398 = vmatpush1.xpose.msra.mxu0 0.0
      %1399 = vmatprep.subr.mxu0 0.0
      %1400 = vmatpush1.xpose.msra.mxu0 0.0
      %1401 = vmatprep.subr.mxu0 0.0
      %1402 = vmatpush1.xpose.msra.mxu0 0.0
      %1403 = vmatprep.subr.mxu0 0.0
      %1404 = vmatpush1.xpose.msra.mxu0 0.0
      %1405 = vmatprep.subr.mxu0 0.0
      %1406 = vmatpush1.xpose.msra.mxu0 0.0
      %1407 = vmatprep.subr.mxu0 0.0
      %1408 = vmatpush1.xpose.msra.mxu0 0.0
      %1409 = vmatprep.subr.mxu0 0.0
      %1410 = vmatpush1.xpose.msra.mxu0 0.0
      %1411 = vmatprep.subr.mxu0 0.0
      %1412 = vmatpush1.xpose.msra.mxu0 0.0
      %1413 = vmatprep.subr.mxu0 0.0
      %1414 = vmatpush1.xpose.msra.mxu0 0.0
      %1415 = vmatprep.subr.mxu0 0.0
      %1416 = vmatpush1.xpose.msra.mxu0 0.0
      %1417 = vmatprep.subr.mxu0 0.0
      %1418 = vmatpush1.xpose.msra.mxu0 0.0
      %1419 = vmatprep.subr.mxu0 0.0
      %1420 = vmatpush1.xpose.msra.mxu0 0.0
      %1421 = vmatprep.subr.mxu0 0.0
      %1422 = vmatpush1.xpose.msra.mxu0 0.0
      %1423 = vmatprep.subr.mxu0 0.0
      %1424 = vmatpush1.xpose.msra.mxu0 0.0
      %1425 = vmatprep.subr.mxu0 0.0
      %1426 = vmatpush1.xpose.msra.mxu0 0.0
      %1427 = vmatprep.subr.mxu0 0.0
      %1428 = vmatpush1.xpose.msra.mxu0 0.0
      %1429 = vmatprep.subr.mxu0 0.0
      %1430 = vmatpush1.xpose.msra.mxu0 0.0
      %1431 = vmatprep.subr.mxu0 0.0
      %1432 = vmatpush1.xpose.msra.mxu0 0.0
      %1433 = vmatprep.subr.mxu0 0.0
      %1434 = vmatpush1.xpose.msra.mxu0 0.0
      %1435 = vmatprep.subr.mxu0 0.0
      %1436 = vmatpush1.xpose.msra.mxu0 0.0
      %1437 = vmatprep.subr.mxu0 0.0
      %1438 = vmatpush1.xpose.msra.mxu0 0.0
      %1439 = vmatprep.subr.mxu0 0.0
      %1440 = vmatpush1.xpose.msra.mxu0 0.0
      %1441 = vmatprep.subr.mxu0 0.0
      %1442 = vmatpush1.xpose.msra.mxu0 0.0
      %1443 = vmatprep.subr.mxu0 0.0
      %1444 = vmatpush1.xpose.msra.mxu0 0.0
      %1445 = vmatprep.subr.mxu0 0.0
      %1446 = vmatpush1.xpose.msra.mxu0 0.0
      %1447 = vmatprep.mubr.f32.mxu0 0.0
      %1448 = vmatmul.mubr.f32.gmra.mrb[0].mxu0 %v1381
      %v1449 = vpop.f32.mrb[0].mxu0
      %v1450 = vadd.f32 %v1377, %v1449
      %v1451 = vpop.f32.mrb[0].mxu0
      %1452 = vdwg.mxu0
      %1454 = vrot.lane.b32.xlu0 %v1450, 40
      %v1455 = vpop.permute.xlu0 %1454
      %vm1457 = vcmask 392512
      %1458 = vst.msk [vmem:[%s421] sm:$0xff] %vm1457, %v1455
      %1459 = vset.pattern.permute.xlu0 6
      %1460 = vperm.xlu0 %1459, %v956
      %v1461 = vpop.permute.xlu0 %1460
      %1463 = vrot.lane.b32.xlu0 %v876, 64
      %v1464 = vpop.permute.xlu0 %1463
      %v1465 = vsel %vm443, %v1464, 0
      %1467 = vmatprep.subr.mxu0 0.0
      %1468 = vmatpush1.xpose.msra.mxu0 %v967
      %1469 = vmatprep.subr.mxu0 0.0
      %1470 = vmatpush1.xpose.msra.mxu0 0.0
      %1471 = vmatprep.subr.mxu0 0.0
      %1472 = vmatpush1.xpose.msra.mxu0 0.0
      %1473 = vmatprep.subr.mxu0 0.0
      %1474 = vmatpush1.xpose.msra.mxu0 0.0
      %1475 = vmatprep.subr.mxu0 0.0
      %1476 = vmatpush1.xpose.msra.mxu0 0.0
      %1477 = vmatprep.subr.mxu0 0.0
      %1478 = vmatpush1.xpose.msra.mxu0 0.0
      %1479 = vmatprep.subr.mxu0 0.0
      %1480 = vmatpush1.xpose.msra.mxu0 0.0
      %1481 = vmatprep.subr.mxu0 0.0
      %1482 = vmatpush1.xpose.msra.mxu0 0.0
      %1483 = vmatprep.subr.mxu0 0.0
      %1484 = vmatpush1.xpose.msra.mxu0 0.0
      %1485 = vmatprep.subr.mxu0 0.0
      %1486 = vmatpush1.xpose.msra.mxu0 0.0
      %1487 = vmatprep.subr.mxu0 0.0
      %1488 = vmatpush1.xpose.msra.mxu0 0.0
      %1489 = vmatprep.subr.mxu0 0.0
      %1490 = vmatpush1.xpose.msra.mxu0 0.0
      %1491 = vmatprep.subr.mxu0 0.0
      %1492 = vmatpush1.xpose.msra.mxu0 0.0
      %1493 = vmatprep.subr.mxu0 0.0
      %1494 = vmatpush1.xpose.msra.mxu0 0.0
      %1495 = vmatprep.subr.mxu0 0.0
      %1496 = vmatpush1.xpose.msra.mxu0 0.0
      %1497 = vmatprep.subr.mxu0 0.0
      %1498 = vmatpush1.xpose.msra.mxu0 0.0
      %1499 = vmatprep.subr.mxu0 0.0
      %1500 = vmatpush1.xpose.msra.mxu0 0.0
      %1501 = vmatprep.subr.mxu0 0.0
      %1502 = vmatpush1.xpose.msra.mxu0 0.0
      %1503 = vmatprep.subr.mxu0 0.0
      %1504 = vmatpush1.xpose.msra.mxu0 0.0
      %1505 = vmatprep.subr.mxu0 0.0
      %1506 = vmatpush1.xpose.msra.mxu0 0.0
      %1507 = vmatprep.subr.mxu0 0.0
      %1508 = vmatpush1.xpose.msra.mxu0 0.0
      %1509 = vmatprep.subr.mxu0 0.0
      %1510 = vmatpush1.xpose.msra.mxu0 0.0
      %1511 = vmatprep.subr.mxu0 0.0
      %1512 = vmatpush1.xpose.msra.mxu0 0.0
      %1513 = vmatprep.subr.mxu0 0.0
      %1514 = vmatpush1.xpose.msra.mxu0 0.0
      %1515 = vmatprep.subr.mxu0 0.0
      %1516 = vmatpush1.xpose.msra.mxu0 0.0
      %1517 = vmatprep.subr.mxu0 0.0
      %1518 = vmatpush1.xpose.msra.mxu0 0.0
      %1519 = vmatprep.subr.mxu0 0.0
      %1520 = vmatpush1.xpose.msra.mxu0 0.0
      %1521 = vmatprep.subr.mxu0 0.0
      %1522 = vmatpush1.xpose.msra.mxu0 0.0
      %1523 = vmatprep.subr.mxu0 0.0
      %1524 = vmatpush1.xpose.msra.mxu0 0.0
      %1525 = vmatprep.subr.mxu0 0.0
      %1526 = vmatpush1.xpose.msra.mxu0 0.0
      %1527 = vmatprep.subr.mxu0 0.0
      %1528 = vmatpush1.xpose.msra.mxu0 0.0
      %1529 = vmatprep.subr.mxu0 0.0
      %1530 = vmatpush1.xpose.msra.mxu0 0.0
      %1531 = vmatprep.mubr.f32.mxu0 0.0
      %1532 = vmatmul.mubr.f32.gmra.mrb[0].mxu0 %v1465
      %v1533 = vpop.f32.mrb[0].mxu0
      %v1534 = vadd.f32 %v1461, %v1533
      %v1535 = vpop.f32.mrb[0].mxu0
      %1536 = vdwg.mxu0
      %1538 = vrot.lane.b32.xlu0 %v1534, 48
      %v1539 = vpop.permute.xlu0 %1538
      %vm1541 = vcmask 458112
      %1542 = vst.msk [vmem:[%s421] sm:$0xff] %vm1541, %v1539
      %1543 = vset.pattern.permute.xlu0 7
      %1544 = vperm.xlu0 %1543, %v956
      %v1545 = vpop.permute.xlu0 %1544
      %1547 = vrot.lane.b32.xlu0 %v876, 32
      %v1548 = vpop.permute.xlu0 %1547
      %v1549 = vsel %vm443, %v1548, 0
      %1551 = vmatprep.subr.mxu0 0.0
      %1552 = vmatpush1.xpose.msra.mxu0 %v967
      %1553 = vmatprep.subr.mxu0 0.0
      %1554 = vmatpush1.xpose.msra.mxu0 0.0
      %1555 = vmatprep.subr.mxu0 0.0
      %1556 = vmatpush1.xpose.msra.mxu0 0.0
      %1557 = vmatprep.subr.mxu0 0.0
      %1558 = vmatpush1.xpose.msra.mxu0 0.0
      %1559 = vmatprep.subr.mxu0 0.0
      %1560 = vmatpush1.xpose.msra.mxu0 0.0
      %1561 = vmatprep.subr.mxu0 0.0
      %1562 = vmatpush1.xpose.msra.mxu0 0.0
      %1563 = vmatprep.subr.mxu0 0.0
      %1564 = vmatpush1.xpose.msra.mxu0 0.0
      %1565 = vmatprep.subr.mxu0 0.0
      %1566 = vmatpush1.xpose.msra.mxu0 0.0
      %1567 = vmatprep.subr.mxu0 0.0
      %1568 = vmatpush1.xpose.msra.mxu0 0.0
      %1569 = vmatprep.subr.mxu0 0.0
      %1570 = vmatpush1.xpose.msra.mxu0 0.0
      %1571 = vmatprep.subr.mxu0 0.0
      %1572 = vmatpush1.xpose.msra.mxu0 0.0
      %1573 = vmatprep.subr.mxu0 0.0
      %1574 = vmatpush1.xpose.msra.mxu0 0.0
      %1575 = vmatprep.subr.mxu0 0.0
      %1576 = vmatpush1.xpose.msra.mxu0 0.0
      %1577 = vmatprep.subr.mxu0 0.0
      %1578 = vmatpush1.xpose.msra.mxu0 0.0
      %1579 = vmatprep.subr.mxu0 0.0
      %1580 = vmatpush1.xpose.msra.mxu0 0.0
      %1581 = vmatprep.subr.mxu0 0.0
      %1582 = vmatpush1.xpose.msra.mxu0 0.0
      %1583 = vmatprep.subr.mxu0 0.0
      %1584 = vmatpush1.xpose.msra.mxu0 0.0
      %1585 = vmatprep.subr.mxu0 0.0
      %1586 = vmatpush1.xpose.msra.mxu0 0.0
      %1587 = vmatprep.subr.mxu0 0.0
      %1588 = vmatpush1.xpose.msra.mxu0 0.0
      %1589 = vmatprep.subr.mxu0 0.0
      %1590 = vmatpush1.xpose.msra.mxu0 0.0
      %1591 = vmatprep.subr.mxu0 0.0
      %1592 = vmatpush1.xpose.msra.mxu0 0.0
      %1593 = vmatprep.subr.mxu0 0.0
      %1594 = vmatpush1.xpose.msra.mxu0 0.0
      %1595 = vmatprep.subr.mxu0 0.0
      %1596 = vmatpush1.xpose.msra.mxu0 0.0
      %1597 = vmatprep.subr.mxu0 0.0
      %1598 = vmatpush1.xpose.msra.mxu0 0.0
      %1599 = vmatprep.subr.mxu0 0.0
      %1600 = vmatpush1.xpose.msra.mxu0 0.0
      %1601 = vmatprep.subr.mxu0 0.0
      %1602 = vmatpush1.xpose.msra.mxu0 0.0
      %1603 = vmatprep.subr.mxu0 0.0
      %1604 = vmatpush1.xpose.msra.mxu0 0.0
      %1605 = vmatprep.subr.mxu0 0.0
      %1606 = vmatpush1.xpose.msra.mxu0 0.0
      %1607 = vmatprep.subr.mxu0 0.0
      %1608 = vmatpush1.xpose.msra.mxu0 0.0
      %1609 = vmatprep.subr.mxu0 0.0
      %1610 = vmatpush1.xpose.msra.mxu0 0.0
      %1611 = vmatprep.subr.mxu0 0.0
      %1612 = vmatpush1.xpose.msra.mxu0 0.0
      %1613 = vmatprep.subr.mxu0 0.0
      %1614 = vmatpush1.xpose.msra.mxu0 0.0
      %1615 = vmatprep.mubr.f32.mxu0 0.0
      %1616 = vmatmul.mubr.f32.gmra.mrb[0].mxu0 %v1549
      %v1617 = vpop.f32.mrb[0].mxu0
      %v1618 = vadd.f32 %v1545, %v1617
      %v1619 = vpop.f32.mrb[0].mxu0
      %1620 = vdwg.mxu0
      %1622 = vrot.lane.b32.xlu0 %v1618, 56
      %v1623 = vpop.permute.xlu0 %1622
      %vm1625 = vcmask 523712
      %1626 = vst.msk [vmem:[%s421] sm:$0xff] %vm1625, %v1623
      %p1627 = scmp.lt.s32.totalorder %s26, 1
      %s1628 = scalar_select %p1627, %s26, 1
      %s1629 = smul.addr %s1628, 8
      %s1630 = scalar_lea.vmem %s11, %s1629
      %p1631 = scmp.lt.s32.totalorder %s26, 1
      %s1632 = scalar_select %p1631, %s26, 1
      %s1633 = smul.addr %s1632, 8
      %s1634 = scalar_lea.vmem %s12, %s1633
      // Predicated region
      $region65: #{biaffine_parser_forward.1} parent=63 // pred_check
        %p1635 = pneg %p280
      $region66: #{biaffine_parser_forward.1} parent=63 // pred_check_branch
        %1637 = sbr.rel (%p1635) target = $region68
      $region67: #{biaffine_parser_forward.1} parent=63 // pred_region
        _
      $region68: #{biaffine_parser_forward.1} parent=63 // pred_fallthru
        _
      // Predicated region
      $region69: #{biaffine_parser_forward.1} parent=63 // pred_check
        %p1638 = pneg %p306
      $region70: #{biaffine_parser_forward.1} parent=63 // pred_check_branch
        %1640 = sbr.rel (%p1638) target = $region72
      $region71: #{biaffine_parser_forward.1} parent=63 // pred_region
        _
      $region72: #{biaffine_parser_forward.1} parent=63 // pred_fallthru
        _
    $region64: #{biaffine_parser_forward.1} parent=5 // pred_fallthru
      _
    %p1641 = scmp.le.s32.totalorder 2, %s21
    // Predicated region
    $region73: #{biaffine_parser_forward.1} parent=5 // pred_check
      %p1642 = pneg %p1641
    $region74: #{biaffine_parser_forward.1} parent=5 // pred_check_branch
      %1644 = sbr.rel (%p1642) target = $region76
    $region75: #{biaffine_parser_forward.1} parent=5 // pred_region
      %s1645 = ssub.s32 %s21, 2
      // Predicated region
      $region77: #{biaffine_parser_forward.1} parent=75 // pred_check
        %p1646 = pneg %p286
      $region78: #{biaffine_parser_forward.1} parent=75 // pred_check_branch
        %1648 = sbr.rel (%p1646) target = $region80
      $region79: #{biaffine_parser_forward.1} parent=75 // pred_region
        %p1649 = scmp.lt.s32.totalorder %s27, 1
        %s1650 = scalar_select %p1649, %s27, 1
        %s1651 = smul.addr %s1650, 8
        %s1652 = scalar_lea.vmem %s11, %s1651
      $region80: #{biaffine_parser_forward.1} parent=75 // pred_fallthru
        _
      // Predicated region
      $region81: #{biaffine_parser_forward.1} parent=75 // pred_check
        %p1653 = pneg %p312
      $region82: #{biaffine_parser_forward.1} parent=75 // pred_check_branch
        %1655 = sbr.rel (%p1653) target = $region84
      $region83: #{biaffine_parser_forward.1} parent=75 // pred_region
        %p1656 = scmp.lt.s32.totalorder %s27, 1
        %s1657 = scalar_select %p1656, %s27, 1
        %s1658 = smul.addr %s1657, 8
        %s1659 = scalar_lea.vmem %s12, %s1658
      $region84: #{biaffine_parser_forward.1} parent=75 // pred_fallthru
        _
    $region76: #{biaffine_parser_forward.1} parent=5 // pred_fallthru
      _
  $region6: #{biaffine_parser_forward.1} parent=0 // loop_footer
    %s25 = sadd.s32 1, %s21
  $region7: #{biaffine_parser_forward.1} parent=0 // loop_footer_branch
    %20 = sbr.rel target = $region3
  $region8: #{biaffine_parser_forward.1} parent=0 // loop_exit
    _

</llo_original>
